<compile_context>
chip_gen: v6e
topology: v6e:2x2x1
jax: 0.10.0
libtpu: 0.0.40
codegen_flags: <defaults>
</compile_context>

<pallas_src>
import functools

import jax
import jax.numpy as jnp
from jax import lax
from jax.experimental import pallas as pl
from jax.experimental.pallas import tpu as pltpu


def _round_up(n, m):
    return ((n + m - 1) // m) * m


def _pad_to(a, shape):
    pads = [(0, s - d) for d, s in zip(a.shape, shape)]
    if any(hi for _, hi in pads):
        a = jnp.pad(a, pads)
    return a


def self_attention_kernel(
    x_ref,                      # [Bb, Tp, Dp]  bf16
    w0_ref, b0_ref,             # [Dp, Hp] bf16, [1, Hp] f32
    wq_ref, bq_ref,             # [Hp, Hp] bf16, [1, Hp] f32
    wk_ref, bk_ref,
    wv_ref, bv_ref,
    w1_ref, b1_ref,
    out_ref,                    # [Bb, Tp, Hp]
    *, depth: int, bb: int, tp: int, t: int, dp: int, hp: int, kv_block: int,
):
    f32 = jnp.float32
    bf16 = jnp.bfloat16
    rows = bb * tp

    # x already bf16 in VMEM; flatten [Bb, Tp, Dp] -> [rows, Dp] (layout no-op,
    # Tp is a multiple of the packed bf16 sublane tile).
    x = x_ref[...].reshape(rows, dp)

    # Weights/biases: constant block index => loaded once, live in VMEM.
    w0 = w0_ref[...]
    wq = wq_ref[...]
    wk = wk_ref[...]
    wv = wv_ref[...]
    w1 = w1_ref[...]
    # Biases stay [1, Hp]: the add broadcasts via replicated-layout vregs, no
    # [rows, Hp] materialization across the depth loop.
    b0 = b0_ref[...]
    bq = bq_ref[...]
    bk = bk_ref[...]
    bv = bv_ref[...]
    b1 = b1_ref[...]

    # fc0: Linear -> ReLU   (Dropout = identity in eval mode)
    hs = jnp.maximum(jnp.dot(x, w0, preferred_element_type=f32) + b0, 0.0)

    qk_dims = (((2,), (2,)), ((0,), (0,)))   # contract feature dim; batch over Bb
    pv_dims = (((2,), (1,)), ((0,), (0,)))   # contract key dim;     batch over Bb
    neg_big = jnp.float32(-1e30)

    def depth_body(_, hs):
        hsb = hs.astype(bf16)
        # q / k / v heads: Linear -> Tanh   (Dropout identity)
        q = jnp.tanh(jnp.dot(hsb, wq, preferred_element_type=f32) + bq)
        k = jnp.tanh(jnp.dot(hsb, wk, preferred_element_type=f32) + bk)
        v = jnp.tanh(jnp.dot(hsb, wv, preferred_element_type=f32) + bv)

        q3 = q.reshape(bb, tp, hp).astype(bf16)
        k3 = k.reshape(bb, tp, hp).astype(bf16)
        v3 = v.reshape(bb, tp, hp).astype(bf16)

        if kv_block >= tp:
            # -------- monolithic softmax over the whole (short) key axis ------
            s = lax.dot_general(q3, k3, qk_dims, preferred_element_type=f32)
            if tp > t:  # mask padded key positions (static branch)
                kidx = lax.broadcasted_iota(jnp.int32, s.shape, 2)
                s = jnp.where(kidx < t, s, neg_big)
            s = s - jnp.max(s, axis=-1, keepdims=True)
            e = jnp.exp(s)
            p = e * pl.reciprocal(jnp.sum(e, axis=-1, keepdims=True), approx=True)
            ctx = lax.dot_general(p.astype(bf16), v3, pv_dims,
                                  preferred_element_type=f32)          # [Bb,Tp,Hp]
        else:
            # -------- KV-tiled online softmax (flash-style) -------------------
            n_kv = tp // kv_block
            m0 = jnp.full((bb, tp, 1), -1e30, dtype=f32)
            l0 = jnp.zeros((bb, tp, 1), f32)
            a0 = jnp.zeros((bb, tp, hp), f32)

            def kv_body(i, carry):
                m, l, acc = carry
                k_t = lax.dynamic_slice_in_dim(k3, i * kv_block, kv_block, axis=1)
                v_t = lax.dynamic_slice_in_dim(v3, i * kv_block, kv_block, axis=1)
                s = lax.dot_general(q3, k_t, qk_dims, preferred_element_type=f32)
                if tp > t:
                    kidx = lax.broadcasted_iota(jnp.int32, s.shape, 2) + i * kv_block
                    s = jnp.where(kidx < t, s, neg_big)
                m_new = jnp.maximum(m, jnp.max(s, axis=-1, keepdims=True))
                alpha = jnp.exp(m - m_new)
                p = jnp.exp(s - m_new)
                l_new = alpha * l + jnp.sum(p, axis=-1, keepdims=True)
                acc_new = alpha * acc + lax.dot_general(
                    p.astype(bf16), v_t, pv_dims, preferred_element_type=f32)
                return m_new, l_new, acc_new

            m, l, acc = lax.fori_loop(0, n_kv, kv_body, (m0, l0, a0))
            ctx = acc * pl.reciprocal(l, approx=True)                  # [Bb,Tp,Hp]

        # fc1: Linear -> ReLU   (Dropout identity)
        ctx2 = ctx.reshape(rows, hp).astype(bf16)
        return jnp.maximum(jnp.dot(ctx2, w1, preferred_element_type=f32) + b1, 0.0)

    # Full unroll only for shallow depth; deep stacks keep the loop visible to
    # bound live ranges / vreg pressure.
    hs = lax.fori_loop(0, depth, depth_body, hs, unroll=(depth <= 2))

    out_ref[...] = hs.reshape(bb, tp, hp).astype(out_ref.dtype)


def self_attention(x, params, *, depth=1, kv_block=None, out_dtype=jnp.float32):
    """x: [B, T, input_size] -> [B, T, hidden_size] (eval-mode forward)."""
    B, T, Din = x.shape
    H = params["w0"].shape[1]
    f32, bf16 = jnp.float32, jnp.bfloat16

    # Lane/sublane-aligned padded sizes.  Tp is a multiple of 16 so bf16 tiles
    # are packed-sublane aligned and the attention matmuls always run in bf16.
    Hp = _round_up(H, 128)
    Dp = _round_up(Din, 128)
    Tp = _round_up(T, 16)
    if kv_block is None:
        kv_block = 512                     # monolithic softmax at or below this
    kv_block = _round_up(min(kv_block, Tp), 16)
    if kv_block < Tp:                      # KV-tiled path needs Tp % kv_block == 0
        Tp = _round_up(T, kv_block)

    # ---- generation-aware VMEM budget & batch-block sizing -------------------
    vmem_cap = 64 * 1024 * 1024            # conservative default (v7x per-TC)
    try:
        cap = getattr(pltpu.get_tpu_info(), "vmem_capacity_bytes", None)
        if cap:
            vmem_cap = int(cap)
    except Exception:
        pass
    vmem_budget = max(vmem_cap - 12 * 1024 * 1024, 16 * 1024 * 1024)

    out_itemsize = jnp.dtype(out_dtype).itemsize
    tkv = min(kv_block, Tp)
    # Weights live once in VMEM (single-buffered); biases pad to 8 sublanes.
    weight_vmem = (Dp * Hp + 4 * Hp * Hp) * 2 + 5 * 8 * Hp * 4
    # Rough per-M-row working set: double-buffered x/out tiles + f32/bf16
    # intermediates (hs, q/k/v, ctx, acc) + score/exp tiles; 25% fudge.
    per_row = int(1.25 * (4 * Dp + 2 * out_itemsize * Hp + 36 * Hp + 12 * tkv))
    rows_fit = max(Tp, (vmem_budget - weight_vmem) // per_row)
    rows_target = min(512, rows_fit)       # MXU M-tile target
    Bb = max(1, min(B, rows_target // Tp))
    if B >= 2:
        # Keep >= 2 grid steps so the "parallel" axis can shard across the two
        # TensorCores of a v7x chip (harmless on 1-TC v5e/v6e).
        Bb = min(Bb, (B + 1) // 2)
    Bp = _round_up(B, Bb)
    grid = Bp // Bb

    # ---- pad & cast operands (x streams in bf16) ------------------------------
    # TODO(synk): for hot-loop callers with unaligned shapes, pre-pad x / fuse the
    # pad+bf16 cast into the producer to avoid this extra HBM round trip.
    x_p = _pad_to(x, (Bp, Tp, Dp)).astype(bf16)

    def pad_w(name, din):
        return _pad_to(params[name], (din, Hp)).astype(bf16)

    def pad_b(name):
        return _pad_to(params[name], (1, Hp)).astype(f32)

    weights = [
        pad_w("w0", Dp), pad_b("b0"),
        pad_w("wq", Hp), pad_b("bq"),
        pad_w("wk", Hp), pad_b("bk"),
        pad_w("wv", Hp), pad_b("bv"),
        pad_w("w1", Hp), pad_b("b1"),
    ]

    kernel = functools.partial(
        self_attention_kernel, depth=depth, bb=Bb, tp=Tp, t=T, dp=Dp, hp=Hp,
        kv_block=kv_block)

    # Advisory cost estimate for XLA scheduling around the custom call.
    rows_total = Bp * Tp
    flops = (2 * rows_total * Dp * Hp
             + depth * (4 * 2 * rows_total * Hp * Hp + 4 * Bp * Tp * Tp * Hp))
    transcendentals = depth * (3 * rows_total * Hp + Bp * Tp * Tp)
    weight_hbm = (Dp * Hp + 4 * Hp * Hp) * 2 + 5 * Hp * 4
    bytes_accessed = Bp * Tp * Dp * 2 + Bp * Tp * Hp * out_itemsize + weight_hbm

    def call(single_buffer_weights):
        in_specs = [pl.BlockSpec((Bb, Tp, Dp), lambda b: (b, 0, 0))]
        for w in weights:
            if single_buffer_weights:
                spec = pl.BlockSpec(w.shape, lambda b: (0, 0),
                                    pipeline_mode=pl.Buffered(1))
            else:
                spec = pl.BlockSpec(w.shape, lambda b: (0, 0))
            in_specs.append(spec)
        out_specs = pl.BlockSpec((Bb, Tp, Hp), lambda b: (b, 0, 0))
        return pl.pallas_call(
            kernel,
            out_shape=jax.ShapeDtypeStruct((Bp, Tp, Hp), out_dtype),
            grid_spec=pltpu.PrefetchScalarGridSpec(
                num_scalar_prefetch=0,
                grid=(grid,),
                in_specs=in_specs,
                out_specs=out_specs,
            ),
            compiler_params=pltpu.CompilerParams(
                dimension_semantics=("parallel",),
                vmem_limit_bytes=int(vmem_budget),
            ),
            cost_estimate=pl.CostEstimate(
                flops=int(flops),
                transcendentals=int(transcendentals),
                bytes_accessed=int(bytes_accessed),
            ),
        )(x_p, *weights)

    try:
        out_p = call(single_buffer_weights=True)
    except Exception:
        # Fallback for jax versions without BlockSpec pipeline_mode support.
        out_p = call(single_buffer_weights=False)

    return out_p[:B, :T, :H]


def init_params(key, input_size, hidden_size):
    keys = jax.random.split(key, 10)

    def lin(kw, kb, din, dout):
        # W stored [in, out] (equivalent to PyTorch x @ W.T + b), b as [1, out].
        w = jax.random.normal(kw, (din, dout), jnp.float32) * (1.0 / jnp.sqrt(din))
        b = jax.random.normal(kb, (1, dout), jnp.float32) * 0.01
        return w, b

    w0, b0 = lin(keys[0], keys[1], input_size, hidden_size)
    wq, bq = lin(keys[2], keys[3], hidden_size, hidden_size)
    wk, bk = lin(keys[4], keys[5], hidden_size, hidden_size)
    wv, bv = lin(keys[6], keys[7], hidden_size, hidden_size)
    w1, b1 = lin(keys[8], keys[9], hidden_size, hidden_size)
    return dict(w0=w0, b0=b0, wq=wq, bq=bq, wk=wk, bk=bk, wv=wv, bv=bv, w1=w1, b1=b1)


def _reference(x, p, depth=1):
    """Pure-JAX reference mimicking the kernel's bf16-operand / f32-accum matmuls."""
    f32, bf16 = jnp.float32, jnp.bfloat16

    def lin(a, w, b):
        y = lax.dot_general(a.astype(bf16), w.astype(bf16),
                            (((a.ndim - 1,), (0,)), ((), ())),
                            preferred_element_type=f32)
        return y + b

    hs = jnp.maximum(lin(x, p["w0"], p["b0"]), 0.0)
    for _ in range(depth):
        q = jnp.tanh(lin(hs, p["wq"], p["bq"]))
        k = jnp.tanh(lin(hs, p["wk"], p["bk"]))
        v = jnp.tanh(lin(hs, p["wv"], p["bv"]))
        a = jnp.einsum("btd,bsd->bts", q.astype(bf16), k.astype(bf16),
                       preferred_element_type=f32)
        a = jax.nn.softmax(a, axis=2)
        ctx = jnp.einsum("bts,bsd->btd", a.astype(bf16), v.astype(bf16),
                         preferred_element_type=f32)
        hs = jnp.maximum(lin(ctx, p["w1"], p["b1"]), 0.0)
    return hs


if __name__ == "__main__":
    key = jax.random.PRNGKey(0)
    kx, kp, kx2 = jax.random.split(key, 3)

    B, T, INPUT, HIDDEN, DEPTH = 2, 8, 16, 32, 1
    x = jax.random.normal(kx, (B, T, INPUT), jnp.float32)
    params = init_params(kp, INPUT, HIDDEN)

    # Short-sequence path (monolithic softmax, 2 parallel grid steps).
    out = jax.block_until_ready(self_attention(x, params, depth=DEPTH))
    ref = _reference(x, params, depth=DEPTH)
    assert out.shape == (B, T, HIDDEN)
    assert jnp.allclose(out, ref, atol=2.5e-2, rtol=2.5e-2), "mismatch vs reference"

    # Exercise the KV-tiled online-softmax path at a small shape (kv_block=16).
    T2 = 40
    x2 = jax.random.normal(kx2, (B, T2, INPUT), jnp.float32)
    out2 = jax.block_until_ready(self_attention(x2, params, depth=DEPTH, kv_block=16))
    ref2 = _reference(x2, params, depth=DEPTH)
    assert out2.shape == (B, T2, HIDDEN)
    assert jnp.allclose(out2, ref2, atol=5e-2, rtol=5e-2), "mismatch vs reference (kv-tiled)"

    print("KERNEL_OK")
</pallas_src>

<mosaic_0001>
module attributes {stable_mosaic.version = 11 : i64} {
  func.func @self_attention_kernel(%arg0: i32, %arg1: memref<1x16x128xbf16, #tpu.memory_space<vmem>>, %arg2: memref<128x128xbf16, #tpu.memory_space<vmem>>, %arg3: memref<1x128xf32, #tpu.memory_space<vmem>>, %arg4: memref<128x128xbf16, #tpu.memory_space<vmem>>, %arg5: memref<1x128xf32, #tpu.memory_space<vmem>>, %arg6: memref<128x128xbf16, #tpu.memory_space<vmem>>, %arg7: memref<1x128xf32, #tpu.memory_space<vmem>>, %arg8: memref<128x128xbf16, #tpu.memory_space<vmem>>, %arg9: memref<1x128xf32, #tpu.memory_space<vmem>>, %arg10: memref<128x128xbf16, #tpu.memory_space<vmem>>, %arg11: memref<1x128xf32, #tpu.memory_space<vmem>>, %arg12: memref<1x16x128xf32, #tpu.memory_space<vmem>>) attributes {dimension_semantics = [#tpu.dimension_semantics<parallel>], iteration_bounds = array<i64: 2>, scalar_prefetch = 0 : i64, scratch_operands = 0 : i64, tpu.core_type = #tpu.core_type<tc>, window_params = [{transform_indices = @transform_0, window_bounds = array<i64: 1, 16, 128>}, {pipeline_mode = #tpu.pipeline_mode<synchronous>, transform_indices = @transform_1, window_bounds = array<i64: 128, 128>}, {pipeline_mode = #tpu.pipeline_mode<synchronous>, transform_indices = @transform_2, window_bounds = array<i64: 1, 128>}, {pipeline_mode = #tpu.pipeline_mode<synchronous>, transform_indices = @transform_3, window_bounds = array<i64: 128, 128>}, {pipeline_mode = #tpu.pipeline_mode<synchronous>, transform_indices = @transform_4, window_bounds = array<i64: 1, 128>}, {pipeline_mode = #tpu.pipeline_mode<synchronous>, transform_indices = @transform_5, window_bounds = array<i64: 128, 128>}, {pipeline_mode = #tpu.pipeline_mode<synchronous>, transform_indices = @transform_6, window_bounds = array<i64: 1, 128>}, {pipeline_mode = #tpu.pipeline_mode<synchronous>, transform_indices = @transform_7, window_bounds = array<i64: 128, 128>}, {pipeline_mode = #tpu.pipeline_mode<synchronous>, transform_indices = @transform_8, window_bounds = array<i64: 1, 128>}, {pipeline_mode = #tpu.pipeline_mode<synchronous>, transform_indices = @transform_9, window_bounds = array<i64: 128, 128>}, {pipeline_mode = #tpu.pipeline_mode<synchronous>, transform_indices = @transform_10, window_bounds = array<i64: 1, 128>}, {transform_indices = @transform_11, window_bounds = array<i64: 1, 16, 128>}]} {
    %c0 = arith.constant 0 : index
    %c0_0 = arith.constant 0 : index
    %c0_1 = arith.constant 0 : index
    %0 = vector.load %arg1[%c0, %c0_0, %c0_1] : memref<1x16x128xbf16, #tpu.memory_space<vmem>>, vector<1x16x128xbf16>
    %1 = vector.shape_cast %0 : vector<1x16x128xbf16> to vector<16x128xbf16>
    %c0_2 = arith.constant 0 : index
    %c0_3 = arith.constant 0 : index
    %2 = vector.load %arg2[%c0_2, %c0_3] : memref<128x128xbf16, #tpu.memory_space<vmem>>, vector<128x128xbf16>
    %c0_4 = arith.constant 0 : index
    %c0_5 = arith.constant 0 : index
    %3 = vector.load %arg4[%c0_4, %c0_5] : memref<128x128xbf16, #tpu.memory_space<vmem>>, vector<128x128xbf16>
    %c0_6 = arith.constant 0 : index
    %c0_7 = arith.constant 0 : index
    %4 = vector.load %arg6[%c0_6, %c0_7] : memref<128x128xbf16, #tpu.memory_space<vmem>>, vector<128x128xbf16>
    %c0_8 = arith.constant 0 : index
    %c0_9 = arith.constant 0 : index
    %5 = vector.load %arg8[%c0_8, %c0_9] : memref<128x128xbf16, #tpu.memory_space<vmem>>, vector<128x128xbf16>
    %c0_10 = arith.constant 0 : index
    %c0_11 = arith.constant 0 : index
    %6 = vector.load %arg10[%c0_10, %c0_11] : memref<128x128xbf16, #tpu.memory_space<vmem>>, vector<128x128xbf16>
    %c0_12 = arith.constant 0 : index
    %c0_13 = arith.constant 0 : index
    %7 = vector.load %arg3[%c0_12, %c0_13] : memref<1x128xf32, #tpu.memory_space<vmem>>, vector<1x128xf32>
    %c0_14 = arith.constant 0 : index
    %c0_15 = arith.constant 0 : index
    %8 = vector.load %arg5[%c0_14, %c0_15] : memref<1x128xf32, #tpu.memory_space<vmem>>, vector<1x128xf32>
    %c0_16 = arith.constant 0 : index
    %c0_17 = arith.constant 0 : index
    %9 = vector.load %arg7[%c0_16, %c0_17] : memref<1x128xf32, #tpu.memory_space<vmem>>, vector<1x128xf32>
    %c0_18 = arith.constant 0 : index
    %c0_19 = arith.constant 0 : index
    %10 = vector.load %arg9[%c0_18, %c0_19] : memref<1x128xf32, #tpu.memory_space<vmem>>, vector<1x128xf32>
    %c0_20 = arith.constant 0 : index
    %c0_21 = arith.constant 0 : index
    %11 = vector.load %arg11[%c0_20, %c0_21] : memref<1x128xf32, #tpu.memory_space<vmem>>, vector<1x128xf32>
    %cst = arith.constant dense<0.000000e+00> : vector<16x128xf32>
    %12 = tpu.matmul %1, %2, %cst {dimension_numbers = #tpu.dot_dimension_numbers<[1], [0], [0], [1], [0, 0, 1, 1], [], []>} : vector<16x128xbf16>, vector<128x128xbf16>, vector<16x128xf32> -> vector<16x128xf32>
    %13 = vector.broadcast %7 : vector<1x128xf32> to vector<16x128xf32>
    %14 = arith.addf %12, %13 : vector<16x128xf32>
    %cst_22 = arith.constant 0.000000e+00 : f32
    %15 = vector.broadcast %cst_22 : f32 to vector<16x128xf32>
    %16 = arith.maximumf %14, %15 : vector<16x128xf32>
    %cst_23 = arith.constant -1.000000e+30 : f32
    %c0_i32 = arith.constant 0 : i32
    %17 = arith.truncf %16 : vector<16x128xf32> to vector<16x128xbf16>
    %cst_24 = arith.constant dense<0.000000e+00> : vector<16x128xf32>
    %18 = tpu.matmul %17, %3, %cst_24 {dimension_numbers = #tpu.dot_dimension_numbers<[1], [0], [0], [1], [0, 0, 1, 1], [], []>} : vector<16x128xbf16>, vector<128x128xbf16>, vector<16x128xf32> -> vector<16x128xf32>
    %19 = vector.broadcast %8 : vector<1x128xf32> to vector<16x128xf32>
    %20 = arith.addf %18, %19 : vector<16x128xf32>
    %21 = math.tanh %20 : vector<16x128xf32>
    %cst_25 = arith.constant dense<0.000000e+00> : vector<16x128xf32>
    %22 = tpu.matmul %17, %4, %cst_25 {dimension_numbers = #tpu.dot_dimension_numbers<[1], [0], [0], [1], [0, 0, 1, 1], [], []>} : vector<16x128xbf16>, vector<128x128xbf16>, vector<16x128xf32> -> vector<16x128xf32>
    %23 = vector.broadcast %9 : vector<1x128xf32> to vector<16x128xf32>
    %24 = arith.addf %22, %23 : vector<16x128xf32>
    %25 = math.tanh %24 : vector<16x128xf32>
    %cst_26 = arith.constant dense<0.000000e+00> : vector<16x128xf32>
    %26 = tpu.matmul %17, %5, %cst_26 {dimension_numbers = #tpu.dot_dimension_numbers<[1], [0], [0], [1], [0, 0, 1, 1], [], []>} : vector<16x128xbf16>, vector<128x128xbf16>, vector<16x128xf32> -> vector<16x128xf32>
    %27 = vector.broadcast %10 : vector<1x128xf32> to vector<16x128xf32>
    %28 = arith.addf %26, %27 : vector<16x128xf32>
    %29 = math.tanh %28 : vector<16x128xf32>
    %30 = vector.shape_cast %21 : vector<16x128xf32> to vector<1x16x128xf32>
    %31 = arith.truncf %30 : vector<1x16x128xf32> to vector<1x16x128xbf16>
    %32 = vector.shape_cast %25 : vector<16x128xf32> to vector<1x16x128xf32>
    %33 = arith.truncf %32 : vector<1x16x128xf32> to vector<1x16x128xbf16>
    %34 = vector.shape_cast %29 : vector<16x128xf32> to vector<1x16x128xf32>
    %35 = arith.truncf %34 : vector<1x16x128xf32> to vector<1x16x128xbf16>
    %cst_27 = arith.constant dense<0.000000e+00> : vector<1x16x16xf32>
    %36 = tpu.matmul %31, %33, %cst_27 {dimension_numbers = #tpu.dot_dimension_numbers<[2], [2], [1], [1], [0, 0, 0, 1, 1, 1], [0], [0]>} : vector<1x16x128xbf16>, vector<1x16x128xbf16>, vector<1x16x16xf32> -> vector<1x16x16xf32>
    %37 = tpu.iota {dimensions = array<i32: 2>} : vector<1x16x16xi32>
    %c8_i32 = arith.constant 8 : i32
    %38 = vector.broadcast %c8_i32 : i32 to vector<1x16x16xi32>
    %39 = arith.cmpi slt, %37, %38 : vector<1x16x16xi32>
    %40 = vector.broadcast %cst_23 : f32 to vector<1x16x16xf32>
    %41 = arith.select %39, %36, %40 : vector<1x16x16xi1>, vector<1x16x16xf32>
    %cst_28 = arith.constant dense<0xFF800000> : vector<1x16xf32>
    %42 = vector.multi_reduction <maximumf>, %41, %cst_28 [2] : vector<1x16x16xf32> to vector<1x16xf32>
    %43 = vector.shape_cast %42 : vector<1x16xf32> to vector<1x16x1xf32>
    %44 = vector.broadcast %43 : vector<1x16x1xf32> to vector<1x16x16xf32>
    %45 = arith.subf %41, %44 : vector<1x16x16xf32>
    %46 = math.exp %45 : vector<1x16x16xf32>
    %cst_29 = arith.constant dense<0.000000e+00> : vector<1x16xf32>
    %47 = vector.multi_reduction <add>, %46, %cst_29 [2] : vector<1x16x16xf32> to vector<1x16xf32>
    %48 = vector.shape_cast %47 : vector<1x16xf32> to vector<1x16x1xf32>
    %49 = tpu.reciprocal %48 {approx = true} : vector<1x16x1xf32> -> vector<1x16x1xf32>
    %50 = vector.broadcast %49 : vector<1x16x1xf32> to vector<1x16x16xf32>
    %51 = arith.mulf %46, %50 : vector<1x16x16xf32>
    %52 = arith.truncf %51 : vector<1x16x16xf32> to vector<1x16x16xbf16>
    %cst_30 = arith.constant dense<0.000000e+00> : vector<1x16x128xf32>
    %53 = tpu.matmul %52, %35, %cst_30 {dimension_numbers = #tpu.dot_dimension_numbers<[2], [1], [1], [2], [0, 0, 0, 1, 1, 2], [0], [0]>} : vector<1x16x16xbf16>, vector<1x16x128xbf16>, vector<1x16x128xf32> -> vector<1x16x128xf32>
    %54 = vector.shape_cast %53 : vector<1x16x128xf32> to vector<16x128xf32>
    %55 = arith.truncf %54 : vector<16x128xf32> to vector<16x128xbf16>
    %cst_31 = arith.constant dense<0.000000e+00> : vector<16x128xf32>
    %56 = tpu.matmul %55, %6, %cst_31 {dimension_numbers = #tpu.dot_dimension_numbers<[1], [0], [0], [1], [0, 0, 1, 1], [], []>} : vector<16x128xbf16>, vector<128x128xbf16>, vector<16x128xf32> -> vector<16x128xf32>
    %57 = vector.broadcast %11 : vector<1x128xf32> to vector<16x128xf32>
    %58 = arith.addf %56, %57 : vector<16x128xf32>
    %cst_32 = arith.constant 0.000000e+00 : f32
    %59 = vector.broadcast %cst_32 : f32 to vector<16x128xf32>
    %60 = arith.maximumf %58, %59 : vector<16x128xf32>
    %61 = vector.shape_cast %60 : vector<16x128xf32> to vector<1x16x128xf32>
    %c0_33 = arith.constant 0 : index
    %c0_34 = arith.constant 0 : index
    %c0_35 = arith.constant 0 : index
    %62 = vector.load %arg12[%c0_33, %c0_34, %c0_35] : memref<1x16x128xf32, #tpu.memory_space<vmem>>, vector<1x16x128xf32>
    tpu.vector_store %arg12[%c0_33, %c0_34, %c0_35], %61 {strides = array<i32>} : memref<1x16x128xf32, #tpu.memory_space<vmem>>, vector<1x16x128xf32>,
    return
  }
  func.func @transform_0(%arg0: i32) -> (i32, i32, i32) {
    %c0_i32 = arith.constant 0 : i32
    %c0_i32_0 = arith.constant 0 : i32
    %c0_i32_1 = arith.constant 0 : i32
    return %arg0, %c0_i32, %c0_i32_0 : i32, i32, i32
  }
  func.func @transform_1(%arg0: i32) -> (i32, i32) {
    %c0_i32 = arith.constant 0 : i32
    %c0_i32_0 = arith.constant 0 : i32
    %c0_i32_1 = arith.constant 0 : i32
    return %c0_i32, %c0_i32_0 : i32, i32
  }
  func.func @transform_2(%arg0: i32) -> (i32, i32) {
    %c0_i32 = arith.constant 0 : i32
    %c0_i32_0 = arith.constant 0 : i32
    %c0_i32_1 = arith.constant 0 : i32
    return %c0_i32, %c0_i32_0 : i32, i32
  }
  func.func @transform_3(%arg0: i32) -> (i32, i32) {
    %c0_i32 = arith.constant 0 : i32
    %c0_i32_0 = arith.constant 0 : i32
    %c0_i32_1 = arith.constant 0 : i32
    return %c0_i32, %c0_i32_0 : i32, i32
  }
  func.func @transform_4(%arg0: i32) -> (i32, i32) {
    %c0_i32 = arith.constant 0 : i32
    %c0_i32_0 = arith.constant 0 : i32
    %c0_i32_1 = arith.constant 0 : i32
    return %c0_i32, %c0_i32_0 : i32, i32
  }
  func.func @transform_5(%arg0: i32) -> (i32, i32) {
    %c0_i32 = arith.constant 0 : i32
    %c0_i32_0 = arith.constant 0 : i32
    %c0_i32_1 = arith.constant 0 : i32
    return %c0_i32, %c0_i32_0 : i32, i32
  }
  func.func @transform_6(%arg0: i32) -> (i32, i32) {
    %c0_i32 = arith.constant 0 : i32
    %c0_i32_0 = arith.constant 0 : i32
    %c0_i32_1 = arith.constant 0 : i32
    return %c0_i32, %c0_i32_0 : i32, i32
  }
  func.func @transform_7(%arg0: i32) -> (i32, i32) {
    %c0_i32 = arith.constant 0 : i32
    %c0_i32_0 = arith.constant 0 : i32
    %c0_i32_1 = arith.constant 0 : i32
    return %c0_i32, %c0_i32_0 : i32, i32
  }
  func.func @transform_8(%arg0: i32) -> (i32, i32) {
    %c0_i32 = arith.constant 0 : i32
    %c0_i32_0 = arith.constant 0 : i32
    %c0_i32_1 = arith.constant 0 : i32
    return %c0_i32, %c0_i32_0 : i32, i32
  }
  func.func @transform_9(%arg0: i32) -> (i32, i32) {
    %c0_i32 = arith.constant 0 : i32
    %c0_i32_0 = arith.constant 0 : i32
    %c0_i32_1 = arith.constant 0 : i32
    return %c0_i32, %c0_i32_0 : i32, i32
  }
  func.func @transform_10(%arg0: i32) -> (i32, i32) {
    %c0_i32 = arith.constant 0 : i32
    %c0_i32_0 = arith.constant 0 : i32
    %c0_i32_1 = arith.constant 0 : i32
    return %c0_i32, %c0_i32_0 : i32, i32
  }
  func.func @transform_11(%arg0: i32) -> (i32, i32, i32) {
    %c0_i32 = arith.constant 0 : i32
    %c0_i32_0 = arith.constant 0 : i32
    %c0_i32_1 = arith.constant 0 : i32
    return %arg0, %c0_i32, %c0_i32_0 : i32, i32, i32
  }
}

module attributes {stable_mosaic.version = 11 : i64} {
  func.func @self_attention_kernel(%arg0: i32, %arg1: memref<1x16x128xbf16, #tpu.memory_space<vmem>>, %arg2: memref<128x128xbf16, #tpu.memory_space<vmem>>, %arg3: memref<1x128xf32, #tpu.memory_space<vmem>>, %arg4: memref<128x128xbf16, #tpu.memory_space<vmem>>, %arg5: memref<1x128xf32, #tpu.memory_space<vmem>>, %arg6: memref<128x128xbf16, #tpu.memory_space<vmem>>, %arg7: memref<1x128xf32, #tpu.memory_space<vmem>>, %arg8: memref<128x128xbf16, #tpu.memory_space<vmem>>, %arg9: memref<1x128xf32, #tpu.memory_space<vmem>>, %arg10: memref<128x128xbf16, #tpu.memory_space<vmem>>, %arg11: memref<1x128xf32, #tpu.memory_space<vmem>>, %arg12: memref<1x16x128xf32, #tpu.memory_space<vmem>>) attributes {dimension_semantics = [#tpu.dimension_semantics<parallel>], iteration_bounds = array<i64: 2>, scalar_prefetch = 0 : i64, scratch_operands = 0 : i64, tpu.core_type = #tpu.core_type<tc>, window_params = [{transform_indices = @transform_0, window_bounds = array<i64: 1, 16, 128>}, {pipeline_mode = #tpu.pipeline_mode<synchronous>, transform_indices = @transform_1, window_bounds = array<i64: 128, 128>}, {pipeline_mode = #tpu.pipeline_mode<synchronous>, transform_indices = @transform_2, window_bounds = array<i64: 1, 128>}, {pipeline_mode = #tpu.pipeline_mode<synchronous>, transform_indices = @transform_3, window_bounds = array<i64: 128, 128>}, {pipeline_mode = #tpu.pipeline_mode<synchronous>, transform_indices = @transform_4, window_bounds = array<i64: 1, 128>}, {pipeline_mode = #tpu.pipeline_mode<synchronous>, transform_indices = @transform_5, window_bounds = array<i64: 128, 128>}, {pipeline_mode = #tpu.pipeline_mode<synchronous>, transform_indices = @transform_6, window_bounds = array<i64: 1, 128>}, {pipeline_mode = #tpu.pipeline_mode<synchronous>, transform_indices = @transform_7, window_bounds = array<i64: 128, 128>}, {pipeline_mode = #tpu.pipeline_mode<synchronous>, transform_indices = @transform_8, window_bounds = array<i64: 1, 128>}, {pipeline_mode = #tpu.pipeline_mode<synchronous>, transform_indices = @transform_9, window_bounds = array<i64: 128, 128>}, {pipeline_mode = #tpu.pipeline_mode<synchronous>, transform_indices = @transform_10, window_bounds = array<i64: 1, 128>}, {transform_indices = @transform_11, window_bounds = array<i64: 1, 16, 128>}]} {
    %c0 = arith.constant 0 : index
    %c0_0 = arith.constant 0 : index
    %c0_1 = arith.constant 0 : index
    %0 = vector.load %arg1[%c0, %c0_0, %c0_1] : memref<1x16x128xbf16, #tpu.memory_space<vmem>>, vector<1x16x128xbf16>
    %1 = vector.shape_cast %0 : vector<1x16x128xbf16> to vector<16x128xbf16>
    %c0_2 = arith.constant 0 : index
    %c0_3 = arith.constant 0 : index
    %2 = vector.load %arg2[%c0_2, %c0_3] : memref<128x128xbf16, #tpu.memory_space<vmem>>, vector<128x128xbf16>
    %c0_4 = arith.constant 0 : index
    %c0_5 = arith.constant 0 : index
    %3 = vector.load %arg4[%c0_4, %c0_5] : memref<128x128xbf16, #tpu.memory_space<vmem>>, vector<128x128xbf16>
    %c0_6 = arith.constant 0 : index
    %c0_7 = arith.constant 0 : index
    %4 = vector.load %arg6[%c0_6, %c0_7] : memref<128x128xbf16, #tpu.memory_space<vmem>>, vector<128x128xbf16>
    %c0_8 = arith.constant 0 : index
    %c0_9 = arith.constant 0 : index
    %5 = vector.load %arg8[%c0_8, %c0_9] : memref<128x128xbf16, #tpu.memory_space<vmem>>, vector<128x128xbf16>
    %c0_10 = arith.constant 0 : index
    %c0_11 = arith.constant 0 : index
    %6 = vector.load %arg10[%c0_10, %c0_11] : memref<128x128xbf16, #tpu.memory_space<vmem>>, vector<128x128xbf16>
    %c0_12 = arith.constant 0 : index
    %c0_13 = arith.constant 0 : index
    %7 = vector.load %arg3[%c0_12, %c0_13] : memref<1x128xf32, #tpu.memory_space<vmem>>, vector<1x128xf32>
    %c0_14 = arith.constant 0 : index
    %c0_15 = arith.constant 0 : index
    %8 = vector.load %arg5[%c0_14, %c0_15] : memref<1x128xf32, #tpu.memory_space<vmem>>, vector<1x128xf32>
    %c0_16 = arith.constant 0 : index
    %c0_17 = arith.constant 0 : index
    %9 = vector.load %arg7[%c0_16, %c0_17] : memref<1x128xf32, #tpu.memory_space<vmem>>, vector<1x128xf32>
    %c0_18 = arith.constant 0 : index
    %c0_19 = arith.constant 0 : index
    %10 = vector.load %arg9[%c0_18, %c0_19] : memref<1x128xf32, #tpu.memory_space<vmem>>, vector<1x128xf32>
    %c0_20 = arith.constant 0 : index
    %c0_21 = arith.constant 0 : index
    %11 = vector.load %arg11[%c0_20, %c0_21] : memref<1x128xf32, #tpu.memory_space<vmem>>, vector<1x128xf32>
    %cst = arith.constant dense<0.000000e+00> : vector<16x128xf32>
    %12 = tpu.matmul %1, %2, %cst {dimension_numbers = #tpu.dot_dimension_numbers<[1], [0], [0], [1], [0, 0, 1, 1], [], []>} : vector<16x128xbf16>, vector<128x128xbf16>, vector<16x128xf32> -> vector<16x128xf32>
    %13 = vector.broadcast %7 : vector<1x128xf32> to vector<16x128xf32>
    %14 = arith.addf %12, %13 : vector<16x128xf32>
    %cst_22 = arith.constant 0.000000e+00 : f32
    %15 = vector.broadcast %cst_22 : f32 to vector<16x128xf32>
    %16 = arith.maximumf %14, %15 : vector<16x128xf32>
    %cst_23 = arith.constant -1.000000e+30 : f32
    %c0_i32 = arith.constant 0 : i32
    %17 = arith.truncf %16 : vector<16x128xf32> to vector<16x128xbf16>
    %cst_24 = arith.constant dense<0.000000e+00> : vector<16x128xf32>
    %18 = tpu.matmul %17, %3, %cst_24 {dimension_numbers = #tpu.dot_dimension_numbers<[1], [0], [0], [1], [0, 0, 1, 1], [], []>} : vector<16x128xbf16>, vector<128x128xbf16>, vector<16x128xf32> -> vector<16x128xf32>
    %19 = vector.broadcast %8 : vector<1x128xf32> to vector<16x128xf32>
    %20 = arith.addf %18, %19 : vector<16x128xf32>
    %21 = math.tanh %20 : vector<16x128xf32>
    %cst_25 = arith.constant dense<0.000000e+00> : vector<16x128xf32>
    %22 = tpu.matmul %17, %4, %cst_25 {dimension_numbers = #tpu.dot_dimension_numbers<[1], [0], [0], [1], [0, 0, 1, 1], [], []>} : vector<16x128xbf16>, vector<128x128xbf16>, vector<16x128xf32> -> vector<16x128xf32>
    %23 = vector.broadcast %9 : vector<1x128xf32> to vector<16x128xf32>
    %24 = arith.addf %22, %23 : vector<16x128xf32>
    %25 = math.tanh %24 : vector<16x128xf32>
    %cst_26 = arith.constant dense<0.000000e+00> : vector<16x128xf32>
    %26 = tpu.matmul %17, %5, %cst_26 {dimension_numbers = #tpu.dot_dimension_numbers<[1], [0], [0], [1], [0, 0, 1, 1], [], []>} : vector<16x128xbf16>, vector<128x128xbf16>, vector<16x128xf32> -> vector<16x128xf32>
    %27 = vector.broadcast %10 : vector<1x128xf32> to vector<16x128xf32>
    %28 = arith.addf %26, %27 : vector<16x128xf32>
    %29 = math.tanh %28 : vector<16x128xf32>
    %30 = vector.shape_cast %21 : vector<16x128xf32> to vector<1x16x128xf32>
    %31 = arith.truncf %30 : vector<1x16x128xf32> to vector<1x16x128xbf16>
    %32 = vector.shape_cast %25 : vector<16x128xf32> to vector<1x16x128xf32>
    %33 = arith.truncf %32 : vector<1x16x128xf32> to vector<1x16x128xbf16>
    %34 = vector.shape_cast %29 : vector<16x128xf32> to vector<1x16x128xf32>
    %35 = arith.truncf %34 : vector<1x16x128xf32> to vector<1x16x128xbf16>
    %cst_27 = arith.constant dense<0.000000e+00> : vector<1x16x16xf32>
    %36 = tpu.matmul %31, %33, %cst_27 {dimension_numbers = #tpu.dot_dimension_numbers<[2], [2], [1], [1], [0, 0, 0, 1, 1, 1], [0], [0]>} : vector<1x16x128xbf16>, vector<1x16x128xbf16>, vector<1x16x16xf32> -> vector<1x16x16xf32>
    %37 = tpu.iota {dimensions = array<i32: 2>} : vector<1x16x16xi32>
    %c8_i32 = arith.constant 8 : i32
    %38 = vector.broadcast %c8_i32 : i32 to vector<1x16x16xi32>
    %39 = arith.cmpi slt, %37, %38 : vector<1x16x16xi32>
    %40 = vector.broadcast %cst_23 : f32 to vector<1x16x16xf32>
    %41 = arith.select %39, %36, %40 : vector<1x16x16xi1>, vector<1x16x16xf32>
    %cst_28 = arith.constant dense<0xFF800000> : vector<1x16xf32>
    %42 = vector.multi_reduction <maximumf>, %41, %cst_28 [2] : vector<1x16x16xf32> to vector<1x16xf32>
    %43 = vector.shape_cast %42 : vector<1x16xf32> to vector<1x16x1xf32>
    %44 = vector.broadcast %43 : vector<1x16x1xf32> to vector<1x16x16xf32>
    %45 = arith.subf %41, %44 : vector<1x16x16xf32>
    %46 = math.exp %45 : vector<1x16x16xf32>
    %cst_29 = arith.constant dense<0.000000e+00> : vector<1x16xf32>
    %47 = vector.multi_reduction <add>, %46, %cst_29 [2] : vector<1x16x16xf32> to vector<1x16xf32>
    %48 = vector.shape_cast %47 : vector<1x16xf32> to vector<1x16x1xf32>
    %49 = tpu.reciprocal %48 {approx = true} : vector<1x16x1xf32> -> vector<1x16x1xf32>
    %50 = vector.broadcast %49 : vector<1x16x1xf32> to vector<1x16x16xf32>
    %51 = arith.mulf %46, %50 : vector<1x16x16xf32>
    %52 = arith.truncf %51 : vector<1x16x16xf32> to vector<1x16x16xbf16>
    %cst_30 = arith.constant dense<0.000000e+00> : vector<1x16x128xf32>
    %53 = tpu.matmul %52, %35, %cst_30 {dimension_numbers = #tpu.dot_dimension_numbers<[2], [1], [1], [2], [0, 0, 0, 1, 1, 2], [0], [0]>} : vector<1x16x16xbf16>, vector<1x16x128xbf16>, vector<1x16x128xf32> -> vector<1x16x128xf32>
    %54 = vector.shape_cast %53 : vector<1x16x128xf32> to vector<16x128xf32>
    %55 = arith.truncf %54 : vector<16x128xf32> to vector<16x128xbf16>
    %cst_31 = arith.constant dense<0.000000e+00> : vector<16x128xf32>
    %56 = tpu.matmul %55, %6, %cst_31 {dimension_numbers = #tpu.dot_dimension_numbers<[1], [0], [0], [1], [0, 0, 1, 1], [], []>} : vector<16x128xbf16>, vector<128x128xbf16>, vector<16x128xf32> -> vector<16x128xf32>
    %57 = vector.broadcast %11 : vector<1x128xf32> to vector<16x128xf32>
    %58 = arith.addf %56, %57 : vector<16x128xf32>
    %cst_32 = arith.constant 0.000000e+00 : f32
    %59 = vector.broadcast %cst_32 : f32 to vector<16x128xf32>
    %60 = arith.maximumf %58, %59 : vector<16x128xf32>
    %61 = vector.shape_cast %60 : vector<16x128xf32> to vector<1x16x128xf32>
    %c0_33 = arith.constant 0 : index
    %c0_34 = arith.constant 0 : index
    %c0_35 = arith.constant 0 : index
    %62 = vector.load %arg12[%c0_33, %c0_34, %c0_35] : memref<1x16x128xf32, #tpu.memory_space<vmem>>, vector<1x16x128xf32>
    tpu.vector_store %arg12[%c0_33, %c0_34, %c0_35], %61 {strides = array<i32>} : memref<1x16x128xf32, #tpu.memory_space<vmem>>, vector<1x16x128xf32>,
    return
  }
  func.func @transform_0(%arg0: i32) -> (i32, i32, i32) {
    %c0_i32 = arith.constant 0 : i32
    %c0_i32_0 = arith.constant 0 : i32
    %c0_i32_1 = arith.constant 0 : i32
    return %arg0, %c0_i32, %c0_i32_0 : i32, i32, i32
  }
  func.func @transform_1(%arg0: i32) -> (i32, i32) {
    %c0_i32 = arith.constant 0 : i32
    %c0_i32_0 = arith.constant 0 : i32
    %c0_i32_1 = arith.constant 0 : i32
    return %c0_i32, %c0_i32_0 : i32, i32
  }
  func.func @transform_2(%arg0: i32) -> (i32, i32) {
    %c0_i32 = arith.constant 0 : i32
    %c0_i32_0 = arith.constant 0 : i32
    %c0_i32_1 = arith.constant 0 : i32
    return %c0_i32, %c0_i32_0 : i32, i32
  }
  func.func @transform_3(%arg0: i32) -> (i32, i32) {
    %c0_i32 = arith.constant 0 : i32
    %c0_i32_0 = arith.constant 0 : i32
    %c0_i32_1 = arith.constant 0 : i32
    return %c0_i32, %c0_i32_0 : i32, i32
  }
  func.func @transform_4(%arg0: i32) -> (i32, i32) {
    %c0_i32 = arith.constant 0 : i32
    %c0_i32_0 = arith.constant 0 : i32
    %c0_i32_1 = arith.constant 0 : i32
    return %c0_i32, %c0_i32_0 : i32, i32
  }
  func.func @transform_5(%arg0: i32) -> (i32, i32) {
    %c0_i32 = arith.constant 0 : i32
    %c0_i32_0 = arith.constant 0 : i32
    %c0_i32_1 = arith.constant 0 : i32
    return %c0_i32, %c0_i32_0 : i32, i32
  }
  func.func @transform_6(%arg0: i32) -> (i32, i32) {
    %c0_i32 = arith.constant 0 : i32
    %c0_i32_0 = arith.constant 0 : i32
    %c0_i32_1 = arith.constant 0 : i32
    return %c0_i32, %c0_i32_0 : i32, i32
  }
  func.func @transform_7(%arg0: i32) -> (i32, i32) {
    %c0_i32 = arith.constant 0 : i32
    %c0_i32_0 = arith.constant 0 : i32
    %c0_i32_1 = arith.constant 0 : i32
    return %c0_i32, %c0_i32_0 : i32, i32
  }
  func.func @transform_8(%arg0: i32) -> (i32, i32) {
    %c0_i32 = arith.constant 0 : i32
    %c0_i32_0 = arith.constant 0 : i32
    %c0_i32_1 = arith.constant 0 : i32
    return %c0_i32, %c0_i32_0 : i32, i32
  }
  func.func @transform_9(%arg0: i32) -> (i32, i32) {
    %c0_i32 = arith.constant 0 : i32
    %c0_i32_0 = arith.constant 0 : i32
    %c0_i32_1 = arith.constant 0 : i32
    return %c0_i32, %c0_i32_0 : i32, i32
  }
  func.func @transform_10(%arg0: i32) -> (i32, i32) {
    %c0_i32 = arith.constant 0 : i32
    %c0_i32_0 = arith.constant 0 : i32
    %c0_i32_1 = arith.constant 0 : i32
    return %c0_i32, %c0_i32_0 : i32, i32
  }
  func.func @transform_11(%arg0: i32) -> (i32, i32, i32) {
    %c0_i32 = arith.constant 0 : i32
    %c0_i32_0 = arith.constant 0 : i32
    %c0_i32_1 = arith.constant 0 : i32
    return %arg0, %c0_i32, %c0_i32_0 : i32, i32, i32
  }
}

</mosaic_0001>

<llo_original>
// kernel: tpu_custom_call.1
$region0: #{tpu_custom_call.1}
  #allocation0 [shape = 'u32[]', space=smem, size = 0x4, offset = 0x4, fixed_abs, tag = 'smem constant byte address 0x4 - core index']
  #allocation1 [shape = 'u32[144,128]{1,0:T(1,128)}', space=vmem, size = 0x12000, scoped, tag = 'internal scratch']
  %s0 = inlined_call_operand.hbm [shape: bf16[2,16,128], index: 0, kind: input, shape index: {}]
  %s1 = inlined_call_operand.hbm [shape: bf16[128,128], index: 1, kind: input, shape index: {}]
  %s2 = inlined_call_operand.vmem [shape: f32[1,128], index: 2, kind: input, shape index: {}]
  %s3 = inlined_call_operand.hbm [shape: bf16[128,128], index: 3, kind: input, shape index: {}]
  %s4 = inlined_call_operand.vmem [shape: f32[1,128], index: 4, kind: input, shape index: {}]
  %s5 = inlined_call_operand.hbm [shape: bf16[128,128], index: 5, kind: input, shape index: {}]
  %s6 = inlined_call_operand.vmem [shape: f32[1,128], index: 6, kind: input, shape index: {}]
  %s7 = inlined_call_operand.hbm [shape: bf16[128,128], index: 7, kind: input, shape index: {}]
  %s8 = inlined_call_operand.vmem [shape: f32[1,128], index: 8, kind: input, shape index: {}]
  %s9 = inlined_call_operand.hbm [shape: bf16[128,128], index: 9, kind: input, shape index: {}]
  %s10 = inlined_call_operand.vmem [shape: f32[1,128], index: 10, kind: input, shape index: {}]
  %s11 = inlined_call_operand.hbm [shape: f32[2,16,128], index: 11, kind: output, shape index: {}]
  %s12 = sld [smem:[#allocation0]]
  $region101: #{tpu_custom_call.1} parent=0
    _
  %s14 = ssub.s32 1, %s12
  %s15 = scalar_select 0, %s14, %s12
  $region1: #{tpu_custom_call.1} parent=0
    #allocation2 [shape = 'u8[8192]{0}', space=vmem, size = 0x2000, scoped, tag = 'input window, operand 0']
    #allocation3 [shape = 's32[2]{0}', space=sflag, size = 0x8, scoped, tag = 'scoped memory for tpu_custom_call.1']
    #allocation4 [shape = 's32[2]{0}', space=sflag, size = 0x8, scoped, tag = 'scoped memory for tpu_custom_call.1']
    #allocation5 [shape = 'u8[32768]{0}', space=vmem, size = 0x8000, scoped, tag = 'input window, operand 1, single buffered']
    #allocation6 [shape = 's32[1]{0}', space=sflag, size = 0x4, scoped, tag = 'scoped memory for tpu_custom_call.1']
    #allocation7 [shape = 'u8[32768]{0}', space=vmem, size = 0x8000, scoped, tag = 'input window, operand 3, single buffered']
    #allocation8 [shape = 'u8[32768]{0}', space=vmem, size = 0x8000, scoped, tag = 'input window, operand 5, single buffered']
    #allocation9 [shape = 's32[1]{0}', space=sflag, size = 0x4, scoped, tag = 'scoped memory for tpu_custom_call.1']
    #allocation10 [shape = 'u8[32768]{0}', space=vmem, size = 0x8000, scoped, tag = 'input window, operand 7, single buffered']
    #allocation11 [shape = 'u8[32768]{0}', space=vmem, size = 0x8000, scoped, tag = 'input window, operand 9, single buffered']
    #allocation12 [shape = 's32[1]{0}', space=sflag, size = 0x4, scoped, tag = 'scoped memory for tpu_custom_call.1']
    #allocation13 [shape = 'u8[16384]{0}', space=vmem, size = 0x4000, scoped, tag = 'output window, operand 0']
    %16 = vsyncpa [#allocation3], 0
    %s17 = scalar_lea.sflag [#allocation3], 1
    %18 = vsyncpa %s17, 0
    %19 = vsyncpa [#allocation6], 0
    %20 = vsyncpa [#allocation9], 0
    %21 = vsyncpa [#allocation12], 0
    %22 = vsyncpa [#allocation4], 0
    %s23 = scalar_lea.sflag [#allocation4], 1
    %24 = vsyncpa %s23, 0
    loop: start=0, step=1, limit=4
    $region2: #{tpu_custom_call.1} parent=1 // loop_pre_header
      _
    $region3: #{tpu_custom_call.1} parent=1 // loop_header
      %s26 = sphi 0, %s30
      %p27 = scmp.ge.s32.totalorder %s26, 4
      %s36 = sphi 0, %s38
      %s39 = sphi 0, %s36
      %s40 = sphi 0, %s39
      %s56 = sphi 0, %s40
      %s60 = sphi 0, %s60
      %s62 = sphi 0, %s60
      %s63 = sphi 0, %s62
      %s77 = sphi 0, %s63
      %s81 = sphi 0, %s81
      %s83 = sphi 0, %s81
      %s84 = sphi 0, %s83
      %s98 = sphi 0, %s84
      %s102 = sphi 0, %s102
      %s104 = sphi 0, %s102
      %s105 = sphi 0, %s104
      %s119 = sphi 0, %s105
      %s123 = sphi 0, %s123
      %s125 = sphi 0, %s123
      %s126 = sphi 0, %s125
      %s140 = sphi 0, %s126
      %s144 = sphi 0, %s144
      %s146 = sphi 0, %s144
      %s147 = sphi 0, %s146
      %s161 = sphi 0, %s147
      %s165 = sphi 0, %s165
      %s167 = sphi 0, %s165
      %s168 = sphi 0, %s167
      %s182 = sphi 0, %s168
      %s186 = sphi 0, %s186
      %s188 = sphi 0, %s186
      %s189 = sphi 0, %s188
      %s203 = sphi 0, %s189
      %s207 = sphi 0, %s207
      %s209 = sphi 0, %s207
      %s210 = sphi 0, %s209
      %s224 = sphi 0, %s210
      %s228 = sphi 0, %s228
      %s230 = sphi 0, %s228
      %s231 = sphi 0, %s230
      %s245 = sphi 0, %s231
      %s249 = sphi 0, %s249
      %s251 = sphi 0, %s249
      %s252 = sphi 0, %s251
      %s266 = sphi 0, %s252
      %s272 = sphi 0, %s274
      %s275 = sphi 0, %s272
      %s276 = sphi 0, %s275
      %s292 = sphi 0, %s276
    $region4: #{tpu_custom_call.1} parent=1 // loop_header_branch
      %29 = sbr.rel (%p27) target = $region8
    $region5: #{tpu_custom_call.1} parent=1 // loop_body
      %s31 = ssub.s32 %s26, 1
      %s32 = ssub.s32 %s26, 2
      %s33 = sadd.s32 %s26, 1
      %s34 = ssub.s32 %s26, %s33
      %p35 = scmp.eq.s32.totalorder %s34, 0
      %s37 = sadd.s32 %s36, 1
      %s38 = scalar_select %p35, %s36, %s37
      %p41 = pneg %p35
      %p42 = scmp.eq.s32.totalorder %s26, 1
      %p43 = por %p41, %p42
      %p44 = scmp.ne.s32.totalorder %s36, %s39
      %p45 = scmp.eq.s32.totalorder %s26, 0
      %p46 = por %p44, %p45
      %p47 = scmp.ne.s32.totalorder %s36, %s39
      %p48 = scmp.eq.s32.totalorder %s31, 1
      %p49 = por %p47, %p48
      %p50 = scmp.ne.s32.totalorder %s39, %s40
      %p51 = scmp.eq.s32.totalorder %s31, 0
      %p52 = por %p50, %p51
      %p53 = scmp.ne.s32.totalorder %s39, %s40
      %p54 = scmp.eq.s32.totalorder %s32, 1
      %p55 = por %p53, %p54
      %p57 = scmp.ne.s32.totalorder %s40, %s56
      %p58 = scmp.eq.s32.totalorder %s32, 0
      %p59 = por %p57, %p58
      %s61 = sadd.s32 %s60, 1
      %p64 = scmp.eq.s32.totalorder %s26, 1
      %p65 = scmp.ne.s32.totalorder %s60, %s62
      %p66 = scmp.eq.s32.totalorder %s26, 0
      %p67 = por %p65, %p66
      %p68 = scmp.ne.s32.totalorder %s60, %s62
      %p69 = scmp.eq.s32.totalorder %s31, 1
      %p70 = por %p68, %p69
      %p71 = scmp.ne.s32.totalorder %s62, %s63
      %p72 = scmp.eq.s32.totalorder %s31, 0
      %p73 = por %p71, %p72
      %p74 = scmp.ne.s32.totalorder %s62, %s63
      %p75 = scmp.eq.s32.totalorder %s32, 1
      %p76 = por %p74, %p75
      %p78 = scmp.ne.s32.totalorder %s63, %s77
      %p79 = scmp.eq.s32.totalorder %s32, 0
      %p80 = por %p78, %p79
      %s82 = sadd.s32 %s81, 1
      %p85 = scmp.eq.s32.totalorder %s26, 1
      %p86 = scmp.ne.s32.totalorder %s81, %s83
      %p87 = scmp.eq.s32.totalorder %s26, 0
      %p88 = por %p86, %p87
      %p89 = scmp.ne.s32.totalorder %s81, %s83
      %p90 = scmp.eq.s32.totalorder %s31, 1
      %p91 = por %p89, %p90
      %p92 = scmp.ne.s32.totalorder %s83, %s84
      %p93 = scmp.eq.s32.totalorder %s31, 0
      %p94 = por %p92, %p93
      %p95 = scmp.ne.s32.totalorder %s83, %s84
      %p96 = scmp.eq.s32.totalorder %s32, 1
      %p97 = por %p95, %p96
      %p99 = scmp.ne.s32.totalorder %s84, %s98
      %p100 = scmp.eq.s32.totalorder %s32, 0
      %p101 = por %p99, %p100
      %s103 = sadd.s32 %s102, 1
      %p106 = scmp.eq.s32.totalorder %s26, 1
      %p107 = scmp.ne.s32.totalorder %s102, %s104
      %p108 = scmp.eq.s32.totalorder %s26, 0
      %p109 = por %p107, %p108
      %p110 = scmp.ne.s32.totalorder %s102, %s104
      %p111 = scmp.eq.s32.totalorder %s31, 1
      %p112 = por %p110, %p111
      %p113 = scmp.ne.s32.totalorder %s104, %s105
      %p114 = scmp.eq.s32.totalorder %s31, 0
      %p115 = por %p113, %p114
      %p116 = scmp.ne.s32.totalorder %s104, %s105
      %p117 = scmp.eq.s32.totalorder %s32, 1
      %p118 = por %p116, %p117
      %p120 = scmp.ne.s32.totalorder %s105, %s119
      %p121 = scmp.eq.s32.totalorder %s32, 0
      %p122 = por %p120, %p121
      %s124 = sadd.s32 %s123, 1
      %p127 = scmp.eq.s32.totalorder %s26, 1
      %p128 = scmp.ne.s32.totalorder %s123, %s125
      %p129 = scmp.eq.s32.totalorder %s26, 0
      %p130 = por %p128, %p129
      %p131 = scmp.ne.s32.totalorder %s123, %s125
      %p132 = scmp.eq.s32.totalorder %s31, 1
      %p133 = por %p131, %p132
      %p134 = scmp.ne.s32.totalorder %s125, %s126
      %p135 = scmp.eq.s32.totalorder %s31, 0
      %p136 = por %p134, %p135
      %p137 = scmp.ne.s32.totalorder %s125, %s126
      %p138 = scmp.eq.s32.totalorder %s32, 1
      %p139 = por %p137, %p138
      %p141 = scmp.ne.s32.totalorder %s126, %s140
      %p142 = scmp.eq.s32.totalorder %s32, 0
      %p143 = por %p141, %p142
      %s145 = sadd.s32 %s144, 1
      %p148 = scmp.eq.s32.totalorder %s26, 1
      %p149 = scmp.ne.s32.totalorder %s144, %s146
      %p150 = scmp.eq.s32.totalorder %s26, 0
      %p151 = por %p149, %p150
      %p152 = scmp.ne.s32.totalorder %s144, %s146
      %p153 = scmp.eq.s32.totalorder %s31, 1
      %p154 = por %p152, %p153
      %p155 = scmp.ne.s32.totalorder %s146, %s147
      %p156 = scmp.eq.s32.totalorder %s31, 0
      %p157 = por %p155, %p156
      %p158 = scmp.ne.s32.totalorder %s146, %s147
      %p159 = scmp.eq.s32.totalorder %s32, 1
      %p160 = por %p158, %p159
      %p162 = scmp.ne.s32.totalorder %s147, %s161
      %p163 = scmp.eq.s32.totalorder %s32, 0
      %p164 = por %p162, %p163
      %s166 = sadd.s32 %s165, 1
      %p169 = scmp.eq.s32.totalorder %s26, 1
      %p170 = scmp.ne.s32.totalorder %s165, %s167
      %p171 = scmp.eq.s32.totalorder %s26, 0
      %p172 = por %p170, %p171
      %p173 = scmp.ne.s32.totalorder %s165, %s167
      %p174 = scmp.eq.s32.totalorder %s31, 1
      %p175 = por %p173, %p174
      %p176 = scmp.ne.s32.totalorder %s167, %s168
      %p177 = scmp.eq.s32.totalorder %s31, 0
      %p178 = por %p176, %p177
      %p179 = scmp.ne.s32.totalorder %s167, %s168
      %p180 = scmp.eq.s32.totalorder %s32, 1
      %p181 = por %p179, %p180
      %p183 = scmp.ne.s32.totalorder %s168, %s182
      %p184 = scmp.eq.s32.totalorder %s32, 0
      %p185 = por %p183, %p184
      %s187 = sadd.s32 %s186, 1
      %p190 = scmp.eq.s32.totalorder %s26, 1
      %p191 = scmp.ne.s32.totalorder %s186, %s188
      %p192 = scmp.eq.s32.totalorder %s26, 0
      %p193 = por %p191, %p192
      %p194 = scmp.ne.s32.totalorder %s186, %s188
      %p195 = scmp.eq.s32.totalorder %s31, 1
      %p196 = por %p194, %p195
      %p197 = scmp.ne.s32.totalorder %s188, %s189
      %p198 = scmp.eq.s32.totalorder %s31, 0
      %p199 = por %p197, %p198
      %p200 = scmp.ne.s32.totalorder %s188, %s189
      %p201 = scmp.eq.s32.totalorder %s32, 1
      %p202 = por %p200, %p201
      %p204 = scmp.ne.s32.totalorder %s189, %s203
      %p205 = scmp.eq.s32.totalorder %s32, 0
      %p206 = por %p204, %p205
      %s208 = sadd.s32 %s207, 1
      %p211 = scmp.eq.s32.totalorder %s26, 1
      %p212 = scmp.ne.s32.totalorder %s207, %s209
      %p213 = scmp.eq.s32.totalorder %s26, 0
      %p214 = por %p212, %p213
      %p215 = scmp.ne.s32.totalorder %s207, %s209
      %p216 = scmp.eq.s32.totalorder %s31, 1
      %p217 = por %p215, %p216
      %p218 = scmp.ne.s32.totalorder %s209, %s210
      %p219 = scmp.eq.s32.totalorder %s31, 0
      %p220 = por %p218, %p219
      %p221 = scmp.ne.s32.totalorder %s209, %s210
      %p222 = scmp.eq.s32.totalorder %s32, 1
      %p223 = por %p221, %p222
      %p225 = scmp.ne.s32.totalorder %s210, %s224
      %p226 = scmp.eq.s32.totalorder %s32, 0
      %p227 = por %p225, %p226
      %s229 = sadd.s32 %s228, 1
      %p232 = scmp.eq.s32.totalorder %s26, 1
      %p233 = scmp.ne.s32.totalorder %s228, %s230
      %p234 = scmp.eq.s32.totalorder %s26, 0
      %p235 = por %p233, %p234
      %p236 = scmp.ne.s32.totalorder %s228, %s230
      %p237 = scmp.eq.s32.totalorder %s31, 1
      %p238 = por %p236, %p237
      %p239 = scmp.ne.s32.totalorder %s230, %s231
      %p240 = scmp.eq.s32.totalorder %s31, 0
      %p241 = por %p239, %p240
      %p242 = scmp.ne.s32.totalorder %s230, %s231
      %p243 = scmp.eq.s32.totalorder %s32, 1
      %p244 = por %p242, %p243
      %p246 = scmp.ne.s32.totalorder %s231, %s245
      %p247 = scmp.eq.s32.totalorder %s32, 0
      %p248 = por %p246, %p247
      %s250 = sadd.s32 %s249, 1
      %p253 = scmp.eq.s32.totalorder %s26, 1
      %p254 = scmp.ne.s32.totalorder %s249, %s251
      %p255 = scmp.eq.s32.totalorder %s26, 0
      %p256 = por %p254, %p255
      %p257 = scmp.ne.s32.totalorder %s249, %s251
      %p258 = scmp.eq.s32.totalorder %s31, 1
      %p259 = por %p257, %p258
      %p260 = scmp.ne.s32.totalorder %s251, %s252
      %p261 = scmp.eq.s32.totalorder %s31, 0
      %p262 = por %p260, %p261
      %p263 = scmp.ne.s32.totalorder %s251, %s252
      %p264 = scmp.eq.s32.totalorder %s32, 1
      %p265 = por %p263, %p264
      %p267 = scmp.ne.s32.totalorder %s252, %s266
      %p268 = scmp.eq.s32.totalorder %s32, 0
      %p269 = por %p267, %p268
      %s270 = ssub.s32 %s26, %s33
      %p271 = scmp.eq.s32.totalorder %s270, 0
      %s273 = sadd.s32 %s272, 1
      %s274 = scalar_select %p271, %s272, %s273
      %p277 = pneg %p271
      %p278 = scmp.eq.s32.totalorder %s26, 1
      %p279 = por %p277, %p278
      %p280 = scmp.ne.s32.totalorder %s272, %s275
      %p281 = scmp.eq.s32.totalorder %s26, 0
      %p282 = por %p280, %p281
      %p283 = scmp.ne.s32.totalorder %s272, %s275
      %p284 = scmp.eq.s32.totalorder %s31, 1
      %p285 = por %p283, %p284
      %p286 = scmp.ne.s32.totalorder %s275, %s276
      %p287 = scmp.eq.s32.totalorder %s31, 0
      %p288 = por %p286, %p287
      %p289 = scmp.ne.s32.totalorder %s275, %s276
      %p290 = scmp.eq.s32.totalorder %s32, 1
      %p291 = por %p289, %p290
      %p293 = scmp.ne.s32.totalorder %s276, %s292
      %p294 = scmp.eq.s32.totalorder %s32, 0
      %p295 = por %p293, %p294
      %p296 = scmp.le.s32.totalorder 1, %s26
      %p297 = scmp.lt.s32.totalorder %s26, 3
      %p298 = pnand %p296, %p297
      %p299 = pneg %p298
      // Predicated region
      $region9: #{tpu_custom_call.1} parent=5 // pred_check
        _
      $region10: #{tpu_custom_call.1} parent=5 // pred_check_branch
        %301 = sbr.rel (%p298) target = $region12
      $region11: #{tpu_custom_call.1} parent=5 // pred_region
        %s302 = ssub.s32 %s26, 1
        // Predicated region
        $region13: #{tpu_custom_call.1} parent=11 // pred_check
          %p303 = pneg %p73
        $region14: #{tpu_custom_call.1} parent=11 // pred_check_branch
          %305 = sbr.rel (%p303) target = $region16
        $region15: #{tpu_custom_call.1} parent=11 // pred_region
          %s307 = ssub.s32 1024, 1024
          %308 = vsyncadd [#allocation6], %s307
          %s309 = sshll.u32 [#allocation5], 4
          %s310 = int_to_ptr.vmem [resolvable:$true] %s309
          %315 = dma.hbm_to_vmem [thread:$0]  %s1, 1024, %s310, [#allocation6], 64, 64, 4
        $region16: #{tpu_custom_call.1} parent=11 // pred_fallthru
          _
        // Predicated region
        $region17: #{tpu_custom_call.1} parent=11 // pred_check
          %p316 = pneg %p94
        $region18: #{tpu_custom_call.1} parent=11 // pred_check_branch
          %318 = sbr.rel (%p316) target = $region20
        $region19: #{tpu_custom_call.1} parent=11 // pred_region
          _
        $region20: #{tpu_custom_call.1} parent=11 // pred_fallthru
          _
        // Predicated region
        $region21: #{tpu_custom_call.1} parent=11 // pred_check
          %p319 = pneg %p115
        $region22: #{tpu_custom_call.1} parent=11 // pred_check_branch
          %321 = sbr.rel (%p319) target = $region24
        $region23: #{tpu_custom_call.1} parent=11 // pred_region
          %s323 = ssub.s32 1024, 1024
          %324 = vsyncadd [#allocation6], %s323
          %s325 = sshll.u32 [#allocation7], 4
          %s326 = int_to_ptr.vmem [resolvable:$true] %s325
          %331 = dma.hbm_to_vmem [thread:$0]  %s3, 1024, %s326, [#allocation6], 64, 64, 4
        $region24: #{tpu_custom_call.1} parent=11 // pred_fallthru
          _
        // Predicated region
        $region25: #{tpu_custom_call.1} parent=11 // pred_check
          %p332 = pneg %p136
        $region26: #{tpu_custom_call.1} parent=11 // pred_check_branch
          %334 = sbr.rel (%p332) target = $region28
        $region27: #{tpu_custom_call.1} parent=11 // pred_region
          _
        $region28: #{tpu_custom_call.1} parent=11 // pred_fallthru
          _
        // Predicated region
        $region29: #{tpu_custom_call.1} parent=11 // pred_check
          %p335 = pneg %p157
        $region30: #{tpu_custom_call.1} parent=11 // pred_check_branch
          %337 = sbr.rel (%p335) target = $region32
        $region31: #{tpu_custom_call.1} parent=11 // pred_region
          %s339 = ssub.s32 1024, 1024
          %340 = vsyncadd [#allocation9], %s339
          %s341 = sshll.u32 [#allocation8], 4
          %s342 = int_to_ptr.vmem [resolvable:$true] %s341
          %347 = dma.hbm_to_vmem [thread:$0]  %s5, 1024, %s342, [#allocation9], 64, 64, 4
        $region32: #{tpu_custom_call.1} parent=11 // pred_fallthru
          _
        // Predicated region
        $region33: #{tpu_custom_call.1} parent=11 // pred_check
          %p348 = pneg %p178
        $region34: #{tpu_custom_call.1} parent=11 // pred_check_branch
          %350 = sbr.rel (%p348) target = $region36
        $region35: #{tpu_custom_call.1} parent=11 // pred_region
          _
        $region36: #{tpu_custom_call.1} parent=11 // pred_fallthru
          _
        // Predicated region
        $region37: #{tpu_custom_call.1} parent=11 // pred_check
          %p351 = pneg %p199
        $region38: #{tpu_custom_call.1} parent=11 // pred_check_branch
          %353 = sbr.rel (%p351) target = $region40
        $region39: #{tpu_custom_call.1} parent=11 // pred_region
          %s355 = ssub.s32 1024, 1024
          %356 = vsyncadd [#allocation9], %s355
          %s357 = sshll.u32 [#allocation10], 4
          %s358 = int_to_ptr.vmem [resolvable:$true] %s357
          %363 = dma.hbm_to_vmem [thread:$0]  %s7, 1024, %s358, [#allocation9], 64, 64, 4
        $region40: #{tpu_custom_call.1} parent=11 // pred_fallthru
          _
        // Predicated region
        $region41: #{tpu_custom_call.1} parent=11 // pred_check
          %p364 = pneg %p220
        $region42: #{tpu_custom_call.1} parent=11 // pred_check_branch
          %366 = sbr.rel (%p364) target = $region44
        $region43: #{tpu_custom_call.1} parent=11 // pred_region
          _
        $region44: #{tpu_custom_call.1} parent=11 // pred_fallthru
          _
        // Predicated region
        $region45: #{tpu_custom_call.1} parent=11 // pred_check
          %p367 = pneg %p241
        $region46: #{tpu_custom_call.1} parent=11 // pred_check_branch
          %369 = sbr.rel (%p367) target = $region48
        $region47: #{tpu_custom_call.1} parent=11 // pred_region
          %s371 = ssub.s32 1024, 1024
          %372 = vsyncadd [#allocation12], %s371
          %s373 = sshll.u32 [#allocation11], 4
          %s374 = int_to_ptr.vmem [resolvable:$true] %s373
          %379 = dma.hbm_to_vmem [thread:$0]  %s9, 1024, %s374, [#allocation12], 64, 64, 4
        $region48: #{tpu_custom_call.1} parent=11 // pred_fallthru
          _
        // Predicated region
        $region49: #{tpu_custom_call.1} parent=11 // pred_check
          %p380 = pneg %p262
        $region50: #{tpu_custom_call.1} parent=11 // pred_check_branch
          %382 = sbr.rel (%p380) target = $region52
        $region51: #{tpu_custom_call.1} parent=11 // pred_region
          _
        $region52: #{tpu_custom_call.1} parent=11 // pred_fallthru
          _
      $region12: #{tpu_custom_call.1} parent=5 // pred_fallthru
        _
      %p383 = scmp.lt.s32.totalorder %s26, 2
      // Predicated region
      $region53: #{tpu_custom_call.1} parent=5 // pred_check
        %p384 = pneg %p383
      $region54: #{tpu_custom_call.1} parent=5 // pred_check_branch
        %386 = sbr.rel (%p384) target = $region56
      $region55: #{tpu_custom_call.1} parent=5 // pred_region
        // Predicated region
        $region57: #{tpu_custom_call.1} parent=55 // pred_check
          %p387 = pneg %p46
        $region58: #{tpu_custom_call.1} parent=55 // pred_check_branch
          %389 = sbr.rel (%p387) target = $region60
        $region59: #{tpu_custom_call.1} parent=55 // pred_region
          %s390 = sand.u32 %s36, 1
          %s391 = scalar_lea.sflag [#allocation3], %s390
          %s392 = sand.u32 %s36, 1
          %s393 = smul.addr %s392, 8
          %s394 = scalar_lea.vmem [#allocation2], %s393
          %s396 = ssub.s32 128, 128
          %397 = vsyncadd %s391, %s396
          %s398 = smul.addr %s26, 2
          %s399 = smul.addr %s398, 64
          %s400 = scalar_lea.hbm %s0, %s399
          %s401 = sshll.u32 %s394, 4
          %s402 = int_to_ptr.vmem [resolvable:$true] %s401
          %407 = dma.hbm_to_vmem [thread:$0]  %s400, 128, %s402, %s391, 64, 64, 4
        $region60: #{tpu_custom_call.1} parent=55 // pred_fallthru
          _
      $region56: #{tpu_custom_call.1} parent=5 // pred_fallthru
        _
      %p408 = scmp.le.s32.totalorder 1, %s26
      %p409 = scmp.lt.s32.totalorder %s26, 3
      %p410 = pnand %p408, %p409
      %p411 = pneg %p410
      // Predicated region
      $region61: #{tpu_custom_call.1} parent=5 // pred_check
        _
      $region62: #{tpu_custom_call.1} parent=5 // pred_check_branch
        %413 = sbr.rel (%p410) target = $region64
      $region63: #{tpu_custom_call.1} parent=5 // pred_region
        %s414 = ssub.s32 %s26, 1
        %s415 = sand.u32 %s39, 1
        %s416 = scalar_lea.sflag [#allocation3], %s415
        %s417 = sand.u32 %s39, 1
        %s418 = smul.addr %s417, 8
        %s419 = scalar_lea.vmem [#allocation2], %s418
        // Predicated region
        $region65: #{tpu_custom_call.1} parent=63 // pred_check
          %p420 = pneg %p52
        $region66: #{tpu_custom_call.1} parent=63 // pred_check_branch
          %422 = sbr.rel (%p420) target = $region68
        $region67: #{tpu_custom_call.1} parent=63 // pred_region
          %423 = dma.done %s416, 128
        $region68: #{tpu_custom_call.1} parent=63 // pred_fallthru
          _
        // Predicated region
        $region69: #{tpu_custom_call.1} parent=63 // pred_check
          %p424 = pneg %p73
        $region70: #{tpu_custom_call.1} parent=63 // pred_check_branch
          %426 = sbr.rel (%p424) target = $region72
        $region71: #{tpu_custom_call.1} parent=63 // pred_region
          %427 = dma.done [#allocation6], 1024
        $region72: #{tpu_custom_call.1} parent=63 // pred_fallthru
          _
        // Predicated region
        $region73: #{tpu_custom_call.1} parent=63 // pred_check
          %p428 = pneg %p115
        $region74: #{tpu_custom_call.1} parent=63 // pred_check_branch
          %430 = sbr.rel (%p428) target = $region76
        $region75: #{tpu_custom_call.1} parent=63 // pred_region
          %431 = dma.done [#allocation6], 1024
        $region76: #{tpu_custom_call.1} parent=63 // pred_fallthru
          _
        // Predicated region
        $region77: #{tpu_custom_call.1} parent=63 // pred_check
          %p432 = pneg %p157
        $region78: #{tpu_custom_call.1} parent=63 // pred_check_branch
          %434 = sbr.rel (%p432) target = $region80
        $region79: #{tpu_custom_call.1} parent=63 // pred_region
          %435 = dma.done [#allocation9], 1024
        $region80: #{tpu_custom_call.1} parent=63 // pred_fallthru
          _
        // Predicated region
        $region81: #{tpu_custom_call.1} parent=63 // pred_check
          %p436 = pneg %p199
        $region82: #{tpu_custom_call.1} parent=63 // pred_check_branch
          %438 = sbr.rel (%p436) target = $region84
        $region83: #{tpu_custom_call.1} parent=63 // pred_region
          %439 = dma.done [#allocation9], 1024
        $region84: #{tpu_custom_call.1} parent=63 // pred_fallthru
          _
        // Predicated region
        $region85: #{tpu_custom_call.1} parent=63 // pred_check
          %p440 = pneg %p241
        $region86: #{tpu_custom_call.1} parent=63 // pred_check_branch
          %442 = sbr.rel (%p440) target = $region88
        $region87: #{tpu_custom_call.1} parent=63 // pred_region
          %443 = dma.done [#allocation12], 1024
        $region88: #{tpu_custom_call.1} parent=63 // pred_fallthru
          _
        %s444 = sand.u32 %s39, 1
        %s445 = scalar_lea.sflag [#allocation3], %s444
        %s446 = sand.u32 %s39, 1
        %s447 = smul.addr %s446, 8
        %s448 = scalar_lea.vmem [#allocation2], %s447
        %p449 = pneg %p52
        %p450 = pneg %p49
        %p451 = pneg %p73
        %p452 = pneg %p70
        %p453 = pneg %p94
        %p454 = pneg %p91
        %p455 = pneg %p115
        %p456 = pneg %p112
        %p457 = pneg %p136
        %p458 = pneg %p133
        %p459 = pneg %p157
        %p460 = pneg %p154
        %p461 = pneg %p178
        %p462 = pneg %p175
        %p463 = pneg %p199
        %p464 = pneg %p196
        %p465 = pneg %p220
        %p466 = pneg %p217
        %p467 = pneg %p241
        %p468 = pneg %p238
        %p469 = pneg %p262
        %p470 = pneg %p259
        %p471 = pneg %p288
        %p472 = pneg %p285
        %s473 = sand.u32 %s275, 1
        %s474 = scalar_lea.sflag [#allocation4], %s473
        %s475 = sand.u32 %s275, 1
        %s476 = smul.addr %s475, 16
        %s477 = scalar_lea.vmem [#allocation13], %s476
        %v479 = vld [vmem:[%s419] sm:$0xf]
        %v480 = vld [vmem:[%s419 + $0x4] sm:$0xf]
        %v481 = vld [vmem:[#allocation5] sm:$0xf]
        %v482 = vld [vmem:[#allocation5 + $0x4] sm:$0xf]
        %v483 = vld [vmem:[#allocation5 + $0x8] sm:$0xf]
        %v484 = vld [vmem:[#allocation5 + $0xc] sm:$0xf]
        %v485 = vld [vmem:[#allocation5 + $0x10] sm:$0xf]
        %v486 = vld [vmem:[#allocation5 + $0x14] sm:$0xf]
        %v487 = vld [vmem:[#allocation5 + $0x18] sm:$0xf]
        %v488 = vld [vmem:[#allocation5 + $0x1c] sm:$0xf]
        %v489 = vld [vmem:[#allocation5 + $0x20] sm:$0xf]
        %v490 = vld [vmem:[#allocation5 + $0x24] sm:$0xf]
        %v491 = vld [vmem:[#allocation5 + $0x28] sm:$0xf]
        %v492 = vld [vmem:[#allocation5 + $0x2c] sm:$0xf]
        %v493 = vld [vmem:[#allocation5 + $0x30] sm:$0xf]
        %v494 = vld [vmem:[#allocation5 + $0x34] sm:$0xf]
        %v495 = vld [vmem:[#allocation5 + $0x38] sm:$0xf]
        %v496 = vld [vmem:[#allocation5 + $0x3c] sm:$0xf]
        %v497 = vld [vmem:[#allocation7] sm:$0xf]
        %v498 = vld [vmem:[#allocation7 + $0x4] sm:$0xf]
        %v499 = vld [vmem:[#allocation7 + $0x8] sm:$0xf]
        %v500 = vld [vmem:[#allocation7 + $0xc] sm:$0xf]
        %v501 = vld [vmem:[#allocation7 + $0x10] sm:$0xf]
        %v502 = vld [vmem:[#allocation7 + $0x14] sm:$0xf]
        %v503 = vld [vmem:[#allocation7 + $0x18] sm:$0xf]
        %v504 = vld [vmem:[#allocation7 + $0x1c] sm:$0xf]
        %v505 = vld [vmem:[#allocation7 + $0x20] sm:$0xf]
        %v506 = vld [vmem:[#allocation7 + $0x24] sm:$0xf]
        %v507 = vld [vmem:[#allocation7 + $0x28] sm:$0xf]
        %v508 = vld [vmem:[#allocation7 + $0x2c] sm:$0xf]
        %v509 = vld [vmem:[#allocation7 + $0x30] sm:$0xf]
        %v510 = vld [vmem:[#allocation7 + $0x34] sm:$0xf]
        %v511 = vld [vmem:[#allocation7 + $0x38] sm:$0xf]
        %v512 = vld [vmem:[#allocation7 + $0x3c] sm:$0xf]
        %v513 = vld [vmem:[#allocation8] sm:$0xf]
        %v514 = vld [vmem:[#allocation8 + $0x4] sm:$0xf]
        %v515 = vld [vmem:[#allocation8 + $0x8] sm:$0xf]
        %v516 = vld [vmem:[#allocation8 + $0xc] sm:$0xf]
        %v517 = vld [vmem:[#allocation8 + $0x10] sm:$0xf]
        %v518 = vld [vmem:[#allocation8 + $0x14] sm:$0xf]
        %v519 = vld [vmem:[#allocation8 + $0x18] sm:$0xf]
        %v520 = vld [vmem:[#allocation8 + $0x1c] sm:$0xf]
        %v521 = vld [vmem:[#allocation8 + $0x20] sm:$0xf]
        %v522 = vld [vmem:[#allocation8 + $0x24] sm:$0xf]
        %v523 = vld [vmem:[#allocation8 + $0x28] sm:$0xf]
        %v524 = vld [vmem:[#allocation8 + $0x2c] sm:$0xf]
        %v525 = vld [vmem:[#allocation8 + $0x30] sm:$0xf]
        %v526 = vld [vmem:[#allocation8 + $0x34] sm:$0xf]
        %v527 = vld [vmem:[#allocation8 + $0x38] sm:$0xf]
        %v528 = vld [vmem:[#allocation8 + $0x3c] sm:$0xf]
        %v529 = vld [vmem:[#allocation10] sm:$0xf]
        %v530 = vld [vmem:[#allocation10 + $0x4] sm:$0xf]
        %v531 = vld [vmem:[#allocation10 + $0x8] sm:$0xf]
        %v532 = vld [vmem:[#allocation10 + $0xc] sm:$0xf]
        %v533 = vld [vmem:[#allocation10 + $0x10] sm:$0xf]
        %v534 = vld [vmem:[#allocation10 + $0x14] sm:$0xf]
        %v535 = vld [vmem:[#allocation10 + $0x18] sm:$0xf]
        %v536 = vld [vmem:[#allocation10 + $0x1c] sm:$0xf]
        %v537 = vld [vmem:[#allocation10 + $0x20] sm:$0xf]
        %v538 = vld [vmem:[#allocation10 + $0x24] sm:$0xf]
        %v539 = vld [vmem:[#allocation10 + $0x28] sm:$0xf]
        %v540 = vld [vmem:[#allocation10 + $0x2c] sm:$0xf]
        %v541 = vld [vmem:[#allocation10 + $0x30] sm:$0xf]
        %v542 = vld [vmem:[#allocation10 + $0x34] sm:$0xf]
        %v543 = vld [vmem:[#allocation10 + $0x38] sm:$0xf]
        %v544 = vld [vmem:[#allocation10 + $0x3c] sm:$0xf]
        %v545 = vld [vmem:[#allocation11] sm:$0xf]
        %v546 = vld [vmem:[#allocation11 + $0x4] sm:$0xf]
        %v547 = vld [vmem:[#allocation11 + $0x8] sm:$0xf]
        %v548 = vld [vmem:[#allocation11 + $0xc] sm:$0xf]
        %v549 = vld [vmem:[#allocation11 + $0x10] sm:$0xf]
        %v550 = vld [vmem:[#allocation11 + $0x14] sm:$0xf]
        %v551 = vld [vmem:[#allocation11 + $0x18] sm:$0xf]
        %v552 = vld [vmem:[#allocation11 + $0x1c] sm:$0xf]
        %v553 = vld [vmem:[#allocation11 + $0x20] sm:$0xf]
        %v554 = vld [vmem:[#allocation11 + $0x24] sm:$0xf]
        %v555 = vld [vmem:[#allocation11 + $0x28] sm:$0xf]
        %v556 = vld [vmem:[#allocation11 + $0x2c] sm:$0xf]
        %v557 = vld [vmem:[#allocation11 + $0x30] sm:$0xf]
        %v558 = vld [vmem:[#allocation11 + $0x34] sm:$0xf]
        %v559 = vld [vmem:[#allocation11 + $0x38] sm:$0xf]
        %v560 = vld [vmem:[#allocation11 + $0x3c] sm:$0xf]
        %v561 = vld [vmem:[%s2] sm:$0x1]
        %v562 = vld [vmem:[%s4] sm:$0x1]
        %v563 = vld [vmem:[%s6] sm:$0x1]
        %v564 = vld [vmem:[%s8] sm:$0x1]
        %v565 = vld [vmem:[%s10] sm:$0x1]
        %v567 = vlaneseq
        %v568 = vshrl.u32 %v567, 7
        %v569 = vsub.s32 0, %v568
        %v570 = vrot.slane %v561, %v569
        %v574 = vunpack.c.l.b16 %v479
        %v575 = vunpack.c.l.b16 %v480
        %v576 = vpack.c.b16 %v575, %v574
        %v594 = vunpack.c.l.b16 %v481
        %v595 = vunpack.c.l.b16 %v482
        %v596 = vunpack.c.l.b16 %v483
        %v597 = vunpack.c.l.b16 %v484
        %v598 = vunpack.c.l.b16 %v485
        %v599 = vunpack.c.l.b16 %v486
        %v600 = vunpack.c.l.b16 %v487
        %v601 = vunpack.c.l.b16 %v488
        %v602 = vunpack.c.l.b16 %v489
        %v603 = vunpack.c.l.b16 %v490
        %v604 = vunpack.c.l.b16 %v491
        %v605 = vunpack.c.l.b16 %v492
        %v606 = vunpack.c.l.b16 %v493
        %v607 = vunpack.c.l.b16 %v494
        %v608 = vunpack.c.l.b16 %v495
        %v609 = vunpack.c.l.b16 %v496
        %v610 = vpack.c.b16 %v595, %v594
        %v611 = vpack.c.b16 %v597, %v596
        %v612 = vpack.c.b16 %v599, %v598
        %v613 = vpack.c.b16 %v601, %v600
        %v614 = vpack.c.b16 %v603, %v602
        %v615 = vpack.c.b16 %v605, %v604
        %v616 = vpack.c.b16 %v607, %v606
        %v617 = vpack.c.b16 %v609, %v608
        %626 = vmatprep.subr.bf16.mxu0 0
        %627 = vmatpush1.bf16.msra.mxu0 %v617
        %628 = vmatprep.subr.bf16.mxu0 0
        %629 = vmatpush1.bf16.msra.mxu0 %v616
        %630 = vmatprep.subr.bf16.mxu0 0
        %631 = vmatpush1.bf16.msra.mxu0 %v615
        %632 = vmatprep.subr.bf16.mxu0 0
        %633 = vmatpush1.bf16.msra.mxu0 %v614
        %634 = vmatprep.subr.bf16.mxu0 0
        %635 = vmatpush1.bf16.msra.mxu0 %v613
        %636 = vmatprep.subr.bf16.mxu0 0
        %637 = vmatpush1.bf16.msra.mxu0 %v612
        %638 = vmatprep.subr.bf16.mxu0 0
        %639 = vmatpush1.bf16.msra.mxu0 %v611
        %640 = vmatprep.subr.bf16.mxu0 0
        %641 = vmatpush1.bf16.msra.mxu0 %v610
        %642 = vmatprep.subr.bf16.mxu0 0
        %643 = vmatpush2.bf16.msra.mxu0 0
        %644 = vmatprep.subr.bf16.mxu0 0
        %645 = vmatpush2.bf16.msra.mxu0 0
        %646 = vmatprep.subr.bf16.mxu0 0
        %647 = vmatpush2.bf16.msra.mxu0 0
        %648 = vmatprep.subr.bf16.mxu0 0
        %649 = vmatpush2.bf16.msra.mxu0 0
        %650 = vmatprep.subr.bf16.mxu0 0
        %651 = vmatpush2.bf16.msra.mxu0 0
        %652 = vmatprep.subr.bf16.mxu0 0
        %653 = vmatpush2.bf16.msra.mxu0 0
        %654 = vmatprep.subr.bf16.mxu0 0
        %655 = vmatpush2.bf16.msra.mxu0 0
        %656 = vmatprep.subr.bf16.mxu0 0
        %657 = vmatpush2.bf16.msra.mxu0 0
        %658 = vmatprep.mubr.bf16.mxu0 0
        %659 = vmatmul.mubr.bf16.gmra.mxu0 %v576
        %v660 = vpop.f32.mrf.mxu0
        %v661 = vadd.f32 %v570, %v660
        %v662 = vpop.f32.mrf.mxu0
        %v663 = vpop.f32.mrf.mxu0
        %v664 = vadd.f32 %v570, %v663
        %v665 = vpop.f32.mrf.mxu0
        %666 = vdwg.mxu0
        %v667 = vmax.f32 %v661, 0.0
        %v668 = vmax.f32 %v664, 0.0
        %v669 = vpack.c.bf16 %v668, %v667
        %v671 = vlaneseq
        %v672 = vshrl.u32 %v671, 7
        %v673 = vsub.s32 0, %v672
        %v674 = vrot.slane %v562, %v673
        %v692 = vunpack.c.l.b16 %v497
        %v693 = vunpack.c.l.b16 %v498
        %v694 = vunpack.c.l.b16 %v499
        %v695 = vunpack.c.l.b16 %v500
        %v696 = vunpack.c.l.b16 %v501
        %v697 = vunpack.c.l.b16 %v502
        %v698 = vunpack.c.l.b16 %v503
        %v699 = vunpack.c.l.b16 %v504
        %v700 = vunpack.c.l.b16 %v505
        %v701 = vunpack.c.l.b16 %v506
        %v702 = vunpack.c.l.b16 %v507
        %v703 = vunpack.c.l.b16 %v508
        %v704 = vunpack.c.l.b16 %v509
        %v705 = vunpack.c.l.b16 %v510
        %v706 = vunpack.c.l.b16 %v511
        %v707 = vunpack.c.l.b16 %v512
        %v708 = vpack.c.b16 %v693, %v692
        %v709 = vpack.c.b16 %v695, %v694
        %v710 = vpack.c.b16 %v697, %v696
        %v711 = vpack.c.b16 %v699, %v698
        %v712 = vpack.c.b16 %v701, %v700
        %v713 = vpack.c.b16 %v703, %v702
        %v714 = vpack.c.b16 %v705, %v704
        %v715 = vpack.c.b16 %v707, %v706
        %724 = vmatprep.subr.bf16.mxu0 0
        %725 = vmatpush1.bf16.msra.mxu0 %v715
        %726 = vmatprep.subr.bf16.mxu0 0
        %727 = vmatpush1.bf16.msra.mxu0 %v714
        %728 = vmatprep.subr.bf16.mxu0 0
        %729 = vmatpush1.bf16.msra.mxu0 %v713
        %730 = vmatprep.subr.bf16.mxu0 0
        %731 = vmatpush1.bf16.msra.mxu0 %v712
        %732 = vmatprep.subr.bf16.mxu0 0
        %733 = vmatpush1.bf16.msra.mxu0 %v711
        %734 = vmatprep.subr.bf16.mxu0 0
        %735 = vmatpush1.bf16.msra.mxu0 %v710
        %736 = vmatprep.subr.bf16.mxu0 0
        %737 = vmatpush1.bf16.msra.mxu0 %v709
        %738 = vmatprep.subr.bf16.mxu0 0
        %739 = vmatpush1.bf16.msra.mxu0 %v708
        %740 = vmatprep.subr.bf16.mxu0 0
        %741 = vmatpush2.bf16.msra.mxu0 0
        %742 = vmatprep.subr.bf16.mxu0 0
        %743 = vmatpush2.bf16.msra.mxu0 0
        %744 = vmatprep.subr.bf16.mxu0 0
        %745 = vmatpush2.bf16.msra.mxu0 0
        %746 = vmatprep.subr.bf16.mxu0 0
        %747 = vmatpush2.bf16.msra.mxu0 0
        %748 = vmatprep.subr.bf16.mxu0 0
        %749 = vmatpush2.bf16.msra.mxu0 0
        %750 = vmatprep.subr.bf16.mxu0 0
        %751 = vmatpush2.bf16.msra.mxu0 0
        %752 = vmatprep.subr.bf16.mxu0 0
        %753 = vmatpush2.bf16.msra.mxu0 0
        %754 = vmatprep.subr.bf16.mxu0 0
        %755 = vmatpush2.bf16.msra.mxu0 0
        %756 = vmatprep.mubr.bf16.mxu0 0
        %757 = vmatmul.mubr.bf16.gmra.mxu0 %v669
        %v758 = vpop.f32.mrf.mxu0
        %v759 = vadd.f32 %v674, %v758
        %v760 = vpop.f32.mrf.mxu0
        %v761 = vpop.f32.mrf.mxu0
        %v762 = vadd.f32 %v674, %v761
        %v763 = vpop.f32.mrf.mxu0
        %764 = vdwg.mxu0
        %v765 = vtanh.pop %v759
        %v766 = vtanh.pop %v762
        %v768 = vlaneseq
        %v769 = vshrl.u32 %v768, 7
        %v770 = vsub.s32 0, %v769
        %v771 = vrot.slane %v563, %v770
        %v789 = vunpack.c.l.b16 %v513
        %v790 = vunpack.c.l.b16 %v514
        %v791 = vunpack.c.l.b16 %v515
        %v792 = vunpack.c.l.b16 %v516
        %v793 = vunpack.c.l.b16 %v517
        %v794 = vunpack.c.l.b16 %v518
        %v795 = vunpack.c.l.b16 %v519
        %v796 = vunpack.c.l.b16 %v520
        %v797 = vunpack.c.l.b16 %v521
        %v798 = vunpack.c.l.b16 %v522
        %v799 = vunpack.c.l.b16 %v523
        %v800 = vunpack.c.l.b16 %v524
        %v801 = vunpack.c.l.b16 %v525
        %v802 = vunpack.c.l.b16 %v526
        %v803 = vunpack.c.l.b16 %v527
        %v804 = vunpack.c.l.b16 %v528
        %v805 = vpack.c.b16 %v790, %v789
        %v806 = vpack.c.b16 %v792, %v791
        %v807 = vpack.c.b16 %v794, %v793
        %v808 = vpack.c.b16 %v796, %v795
        %v809 = vpack.c.b16 %v798, %v797
        %v810 = vpack.c.b16 %v800, %v799
        %v811 = vpack.c.b16 %v802, %v801
        %v812 = vpack.c.b16 %v804, %v803
        %821 = vmatprep.subr.bf16.mxu0 0
        %822 = vmatpush1.bf16.msra.mxu0 %v812
        %823 = vmatprep.subr.bf16.mxu0 0
        %824 = vmatpush1.bf16.msra.mxu0 %v811
        %825 = vmatprep.subr.bf16.mxu0 0
        %826 = vmatpush1.bf16.msra.mxu0 %v810
        %827 = vmatprep.subr.bf16.mxu0 0
        %828 = vmatpush1.bf16.msra.mxu0 %v809
        %829 = vmatprep.subr.bf16.mxu0 0
        %830 = vmatpush1.bf16.msra.mxu0 %v808
        %831 = vmatprep.subr.bf16.mxu0 0
        %832 = vmatpush1.bf16.msra.mxu0 %v807
        %833 = vmatprep.subr.bf16.mxu0 0
        %834 = vmatpush1.bf16.msra.mxu0 %v806
        %835 = vmatprep.subr.bf16.mxu0 0
        %836 = vmatpush1.bf16.msra.mxu0 %v805
        %837 = vmatprep.subr.bf16.mxu0 0
        %838 = vmatpush2.bf16.msra.mxu0 0
        %839 = vmatprep.subr.bf16.mxu0 0
        %840 = vmatpush2.bf16.msra.mxu0 0
        %841 = vmatprep.subr.bf16.mxu0 0
        %842 = vmatpush2.bf16.msra.mxu0 0
        %843 = vmatprep.subr.bf16.mxu0 0
        %844 = vmatpush2.bf16.msra.mxu0 0
        %845 = vmatprep.subr.bf16.mxu0 0
        %846 = vmatpush2.bf16.msra.mxu0 0
        %847 = vmatprep.subr.bf16.mxu0 0
        %848 = vmatpush2.bf16.msra.mxu0 0
        %849 = vmatprep.subr.bf16.mxu0 0
        %850 = vmatpush2.bf16.msra.mxu0 0
        %851 = vmatprep.subr.bf16.mxu0 0
        %852 = vmatpush2.bf16.msra.mxu0 0
        %853 = vmatprep.mubr.bf16.mxu0 0
        %854 = vmatmul.mubr.bf16.gmra.mxu0 %v669
        %v855 = vpop.f32.mrf.mxu0
        %v856 = vadd.f32 %v771, %v855
        %v857 = vpop.f32.mrf.mxu0
        %v858 = vpop.f32.mrf.mxu0
        %v859 = vadd.f32 %v771, %v858
        %v860 = vpop.f32.mrf.mxu0
        %861 = vdwg.mxu0
        %v862 = vtanh.pop %v856
        %v863 = vtanh.pop %v859
        %v865 = vlaneseq
        %v866 = vshrl.u32 %v865, 7
        %v867 = vsub.s32 0, %v866
        %v868 = vrot.slane %v564, %v867
        %v886 = vunpack.c.l.b16 %v529
        %v887 = vunpack.c.l.b16 %v530
        %v888 = vunpack.c.l.b16 %v531
        %v889 = vunpack.c.l.b16 %v532
        %v890 = vunpack.c.l.b16 %v533
        %v891 = vunpack.c.l.b16 %v534
        %v892 = vunpack.c.l.b16 %v535
        %v893 = vunpack.c.l.b16 %v536
        %v894 = vunpack.c.l.b16 %v537
        %v895 = vunpack.c.l.b16 %v538
        %v896 = vunpack.c.l.b16 %v539
        %v897 = vunpack.c.l.b16 %v540
        %v898 = vunpack.c.l.b16 %v541
        %v899 = vunpack.c.l.b16 %v542
        %v900 = vunpack.c.l.b16 %v543
        %v901 = vunpack.c.l.b16 %v544
        %v902 = vpack.c.b16 %v887, %v886
        %v903 = vpack.c.b16 %v889, %v888
        %v904 = vpack.c.b16 %v891, %v890
        %v905 = vpack.c.b16 %v893, %v892
        %v906 = vpack.c.b16 %v895, %v894
        %v907 = vpack.c.b16 %v897, %v896
        %v908 = vpack.c.b16 %v899, %v898
        %v909 = vpack.c.b16 %v901, %v900
        %918 = vmatprep.subr.bf16.mxu0 0
        %919 = vmatpush1.bf16.msra.mxu0 %v909
        %920 = vmatprep.subr.bf16.mxu0 0
        %921 = vmatpush1.bf16.msra.mxu0 %v908
        %922 = vmatprep.subr.bf16.mxu0 0
        %923 = vmatpush1.bf16.msra.mxu0 %v907
        %924 = vmatprep.subr.bf16.mxu0 0
        %925 = vmatpush1.bf16.msra.mxu0 %v906
        %926 = vmatprep.subr.bf16.mxu0 0
        %927 = vmatpush1.bf16.msra.mxu0 %v905
        %928 = vmatprep.subr.bf16.mxu0 0
        %929 = vmatpush1.bf16.msra.mxu0 %v904
        %930 = vmatprep.subr.bf16.mxu0 0
        %931 = vmatpush1.bf16.msra.mxu0 %v903
        %932 = vmatprep.subr.bf16.mxu0 0
        %933 = vmatpush1.bf16.msra.mxu0 %v902
        %934 = vmatprep.subr.bf16.mxu0 0
        %935 = vmatpush2.bf16.msra.mxu0 0
        %936 = vmatprep.subr.bf16.mxu0 0
        %937 = vmatpush2.bf16.msra.mxu0 0
        %938 = vmatprep.subr.bf16.mxu0 0
        %939 = vmatpush2.bf16.msra.mxu0 0
        %940 = vmatprep.subr.bf16.mxu0 0
        %941 = vmatpush2.bf16.msra.mxu0 0
        %942 = vmatprep.subr.bf16.mxu0 0
        %943 = vmatpush2.bf16.msra.mxu0 0
        %944 = vmatprep.subr.bf16.mxu0 0
        %945 = vmatpush2.bf16.msra.mxu0 0
        %946 = vmatprep.subr.bf16.mxu0 0
        %947 = vmatpush2.bf16.msra.mxu0 0
        %948 = vmatprep.subr.bf16.mxu0 0
        %949 = vmatpush2.bf16.msra.mxu0 0
        %950 = vmatprep.mubr.bf16.mxu0 0
        %951 = vmatmul.mubr.bf16.gmra.mxu0 %v669
        %v952 = vpop.f32.mrf.mxu0
        %v953 = vadd.f32 %v868, %v952
        %v954 = vpop.f32.mrf.mxu0
        %v955 = vpop.f32.mrf.mxu0
        %v956 = vadd.f32 %v868, %v955
        %v957 = vpop.f32.mrf.mxu0
        %958 = vdwg.mxu0
        %v959 = vtanh.pop %v953
        %v960 = vtanh.pop %v956
        %v961 = vpack.c.bf16 %v766, %v765
        %v962 = vpack.c.bf16 %v863, %v862
        %v963 = vpack.c.bf16 %v960, %v959
        %964 = vmatprep.subr.bf16.mxu0 0
        %965 = vmatpush1.bf16.xpose.msra.mxu0 0
        %966 = vmatprep.subr.bf16.mxu0 0
        %967 = vmatpush1.bf16.xpose.msra.mxu0 0
        %968 = vmatprep.subr.bf16.mxu0 0
        %969 = vmatpush1.bf16.xpose.msra.mxu0 0
        %970 = vmatprep.subr.bf16.mxu0 0
        %971 = vmatpush1.bf16.xpose.msra.mxu0 0
        %972 = vmatprep.subr.bf16.mxu0 0
        %973 = vmatpush1.bf16.xpose.msra.mxu0 0
        %974 = vmatprep.subr.bf16.mxu0 0
        %975 = vmatpush1.bf16.xpose.msra.mxu0 0
        %976 = vmatprep.subr.bf16.mxu0 0
        %977 = vmatpush1.bf16.xpose.msra.mxu0 0
        %978 = vmatprep.subr.bf16.mxu0 0
        %979 = vmatpush1.bf16.xpose.msra.mxu0 %v962
        %980 = vmatprep.subr.bf16.mxu0 0
        %981 = vmatpush2.bf16.xpose.msra.mxu0 0
        %982 = vmatprep.subr.bf16.mxu0 0
        %983 = vmatpush2.bf16.xpose.msra.mxu0 0
        %984 = vmatprep.subr.bf16.mxu0 0
        %985 = vmatpush2.bf16.xpose.msra.mxu0 0
        %986 = vmatprep.subr.bf16.mxu0 0
        %987 = vmatpush2.bf16.xpose.msra.mxu0 0
        %988 = vmatprep.subr.bf16.mxu0 0
        %989 = vmatpush2.bf16.xpose.msra.mxu0 0
        %990 = vmatprep.subr.bf16.mxu0 0
        %991 = vmatpush2.bf16.xpose.msra.mxu0 0
        %992 = vmatprep.subr.bf16.mxu0 0
        %993 = vmatpush2.bf16.xpose.msra.mxu0 0
        %994 = vmatprep.subr.bf16.mxu0 0
        %995 = vmatpush2.bf16.xpose.msra.mxu0 0
        %996 = vmatprep.mubr.bf16.mxu0 0
        %997 = vmatmul.mubr.bf16.gmra.mxu0 %v961
        %v998 = vpop.f32.mrf.mxu0
        %v999 = vadd.f32 0.0, %v998
        %v1000 = vpop.f32.mrf.mxu0
        %v1001 = vpop.f32.mrf.mxu0
        %v1002 = vadd.f32 0.0, %v1001
        %v1003 = vpop.f32.mrf.mxu0
        %1004 = vdwg.mxu0
        %v1005 = vlaneseq
        %v1006 = vand.u32 %v1005, 127
        %vm1007 = vcmp.lt.s32.totalorder %v1006, 8
        %v1008 = vsel %vm1007, %v999, -1e+30
        %v1009 = vsel %vm1007, %v1002, -1e+30
        %vm1010 = vcmask 130048
        %v1011 = vsel %vm1010, %v1008, -inf
        %1012 = vmax.xlane.f32.xlu0 %v1011
        %v1013 = vpop.xlane.xlu0 %1012
        %v1014 = vsel %vm1010, %v1009, -inf
        %1015 = vmax.xlane.f32.xlu0 %v1014
        %v1016 = vpop.xlane.xlu0 %1015
        %v1017 = vsub.f32 %v1008, %v1013
        %v1018 = vsub.f32 %v1009, %v1016
        %v1019 = vmul.f32 %v1017, 1.442695
        %v1020 = vpow.pop %v1019
        %v1021 = vmul.f32 %v1018, 1.442695
        %v1022 = vpow.pop %v1021
        %v1023 = vsel %vm1010, %v1020, 0.0
        %1024 = vadd.xlane.f32.xlu0 %v1023
        %v1025 = vpop.xlane.xlu0 %1024
        %v1026 = vsel %vm1010, %v1022, 0.0
        %1027 = vadd.xlane.f32.xlu0 %v1026
        %v1028 = vpop.xlane.xlu0 %1027
        %v1029 = vrcp.pop %v1025
        %v1030 = vrcp.pop %v1028
        %v1031 = vmul.f32 %v1020, %v1029
        %v1032 = vmul.f32 %v1022, %v1030
        %v1033 = vpack.c.bf16 %v1032, %v1031
        %v1035 = vsel %vm1010, %v1033, 0
        %1037 = vmatprep.subr.bf16.mxu0 0
        %1038 = vmatpush1.bf16.msra.mxu0 0
        %1039 = vmatprep.subr.bf16.mxu0 0
        %1040 = vmatpush1.bf16.msra.mxu0 0
        %1041 = vmatprep.subr.bf16.mxu0 0
        %1042 = vmatpush1.bf16.msra.mxu0 0
        %1043 = vmatprep.subr.bf16.mxu0 0
        %1044 = vmatpush1.bf16.msra.mxu0 0
        %1045 = vmatprep.subr.bf16.mxu0 0
        %1046 = vmatpush1.bf16.msra.mxu0 0
        %1047 = vmatprep.subr.bf16.mxu0 0
        %1048 = vmatpush1.bf16.msra.mxu0 0
        %1049 = vmatprep.subr.bf16.mxu0 0
        %1050 = vmatpush1.bf16.msra.mxu0 0
        %1051 = vmatprep.subr.bf16.mxu0 0
        %1052 = vmatpush1.bf16.msra.mxu0 %v963
        %1053 = vmatprep.subr.bf16.mxu0 0
        %1054 = vmatpush2.bf16.msra.mxu0 0
        %1055 = vmatprep.subr.bf16.mxu0 0
        %1056 = vmatpush2.bf16.msra.mxu0 0
        %1057 = vmatprep.subr.bf16.mxu0 0
        %1058 = vmatpush2.bf16.msra.mxu0 0
        %1059 = vmatprep.subr.bf16.mxu0 0
        %1060 = vmatpush2.bf16.msra.mxu0 0
        %1061 = vmatprep.subr.bf16.mxu0 0
        %1062 = vmatpush2.bf16.msra.mxu0 0
        %1063 = vmatprep.subr.bf16.mxu0 0
        %1064 = vmatpush2.bf16.msra.mxu0 0
        %1065 = vmatprep.subr.bf16.mxu0 0
        %1066 = vmatpush2.bf16.msra.mxu0 0
        %1067 = vmatprep.subr.bf16.mxu0 0
        %1068 = vmatpush2.bf16.msra.mxu0 0
        %1069 = vmatprep.mubr.bf16.mxu0 0
        %1070 = vmatmul.mubr.bf16.gmra.mxu0 %v1035
        %v1071 = vpop.f32.mrf.mxu0
        %v1072 = vadd.f32 0.0, %v1071
        %v1073 = vpop.f32.mrf.mxu0
        %v1074 = vpop.f32.mrf.mxu0
        %v1075 = vadd.f32 0.0, %v1074
        %v1076 = vpop.f32.mrf.mxu0
        %1077 = vdwg.mxu0
        %v1078 = vpack.c.bf16 %v1075, %v1072
        %v1080 = vlaneseq
        %v1081 = vshrl.u32 %v1080, 7
        %v1082 = vsub.s32 0, %v1081
        %v1083 = vrot.slane %v565, %v1082
        %v1101 = vunpack.c.l.b16 %v545
        %v1102 = vunpack.c.l.b16 %v546
        %v1103 = vunpack.c.l.b16 %v547
        %v1104 = vunpack.c.l.b16 %v548
        %v1105 = vunpack.c.l.b16 %v549
        %v1106 = vunpack.c.l.b16 %v550
        %v1107 = vunpack.c.l.b16 %v551
        %v1108 = vunpack.c.l.b16 %v552
        %v1109 = vunpack.c.l.b16 %v553
        %v1110 = vunpack.c.l.b16 %v554
        %v1111 = vunpack.c.l.b16 %v555
        %v1112 = vunpack.c.l.b16 %v556
        %v1113 = vunpack.c.l.b16 %v557
        %v1114 = vunpack.c.l.b16 %v558
        %v1115 = vunpack.c.l.b16 %v559
        %v1116 = vunpack.c.l.b16 %v560
        %v1117 = vpack.c.b16 %v1102, %v1101
        %v1118 = vpack.c.b16 %v1104, %v1103
        %v1119 = vpack.c.b16 %v1106, %v1105
        %v1120 = vpack.c.b16 %v1108, %v1107
        %v1121 = vpack.c.b16 %v1110, %v1109
        %v1122 = vpack.c.b16 %v1112, %v1111
        %v1123 = vpack.c.b16 %v1114, %v1113
        %v1124 = vpack.c.b16 %v1116, %v1115
        %1133 = vmatprep.subr.bf16.mxu0 0
        %1134 = vmatpush1.bf16.msra.mxu0 %v1124
        %1135 = vmatprep.subr.bf16.mxu0 0
        %1136 = vmatpush1.bf16.msra.mxu0 %v1123
        %1137 = vmatprep.subr.bf16.mxu0 0
        %1138 = vmatpush1.bf16.msra.mxu0 %v1122
        %1139 = vmatprep.subr.bf16.mxu0 0
        %1140 = vmatpush1.bf16.msra.mxu0 %v1121
        %1141 = vmatprep.subr.bf16.mxu0 0
        %1142 = vmatpush1.bf16.msra.mxu0 %v1120
        %1143 = vmatprep.subr.bf16.mxu0 0
        %1144 = vmatpush1.bf16.msra.mxu0 %v1119
        %1145 = vmatprep.subr.bf16.mxu0 0
        %1146 = vmatpush1.bf16.msra.mxu0 %v1118
        %1147 = vmatprep.subr.bf16.mxu0 0
        %1148 = vmatpush1.bf16.msra.mxu0 %v1117
        %1149 = vmatprep.subr.bf16.mxu0 0
        %1150 = vmatpush2.bf16.msra.mxu0 0
        %1151 = vmatprep.subr.bf16.mxu0 0
        %1152 = vmatpush2.bf16.msra.mxu0 0
        %1153 = vmatprep.subr.bf16.mxu0 0
        %1154 = vmatpush2.bf16.msra.mxu0 0
        %1155 = vmatprep.subr.bf16.mxu0 0
        %1156 = vmatpush2.bf16.msra.mxu0 0
        %1157 = vmatprep.subr.bf16.mxu0 0
        %1158 = vmatpush2.bf16.msra.mxu0 0
        %1159 = vmatprep.subr.bf16.mxu0 0
        %1160 = vmatpush2.bf16.msra.mxu0 0
        %1161 = vmatprep.subr.bf16.mxu0 0
        %1162 = vmatpush2.bf16.msra.mxu0 0
        %1163 = vmatprep.subr.bf16.mxu0 0
        %1164 = vmatpush2.bf16.msra.mxu0 0
        %1165 = vmatprep.mubr.bf16.mxu0 0
        %1166 = vmatmul.mubr.bf16.gmra.mxu0 %v1078
        %v1167 = vpop.f32.mrf.mxu0
        %v1168 = vadd.f32 %v1083, %v1167
        %v1169 = vpop.f32.mrf.mxu0
        %v1170 = vpop.f32.mrf.mxu0
        %v1171 = vadd.f32 %v1083, %v1170
        %v1172 = vpop.f32.mrf.mxu0
        %1173 = vdwg.mxu0
        %v1174 = vmax.f32 %v1168, 0.0
        %v1175 = vmax.f32 %v1171, 0.0
        %1176 = vst [vmem:[%s477] sm:$0xff] %v1174
        %1177 = vst [vmem:[%s477 + $0x8] sm:$0xff] %v1175
        %s1178 = sand.u32 %s275, 1
        %s1179 = scalar_lea.sflag [#allocation4], %s1178
        %s1180 = sand.u32 %s275, 1
        %s1181 = smul.addr %s1180, 16
        %s1182 = scalar_lea.vmem [#allocation13], %s1181
        // Predicated region
        $region89: #{tpu_custom_call.1} parent=63 // pred_check
          %p1183 = pneg %p285
        $region90: #{tpu_custom_call.1} parent=63 // pred_check_branch
          %1185 = sbr.rel (%p1183) target = $region92
        $region91: #{tpu_custom_call.1} parent=63 // pred_region
          %s1187 = ssub.s32 256, 256
          %1188 = vsyncadd %s1179, %s1187
          %s1189 = smul.addr %s31, 2
          %s1190 = smul.addr %s1189, 128
          %s1191 = scalar_lea.hbm %s11, %s1190
          %s1192 = sshll.u32 %s1182, 4
          %s1193 = int_to_ptr.vmem [resolvable:$true] %s1192
          %1198 = dma.vmem_to_hbm [thread:$0]  %s1193, 256, %s1191, %s1179, 128, 128, 8
        $region92: #{tpu_custom_call.1} parent=63 // pred_fallthru
          _
      $region64: #{tpu_custom_call.1} parent=5 // pred_fallthru
        _
      %p1199 = scmp.le.s32.totalorder 2, %s26
      // Predicated region
      $region93: #{tpu_custom_call.1} parent=5 // pred_check
        %p1200 = pneg %p1199
      $region94: #{tpu_custom_call.1} parent=5 // pred_check_branch
        %1202 = sbr.rel (%p1200) target = $region96
      $region95: #{tpu_custom_call.1} parent=5 // pred_region
        %s1203 = ssub.s32 %s26, 2
        // Predicated region
        $region97: #{tpu_custom_call.1} parent=95 // pred_check
          %p1204 = pneg %p291
        $region98: #{tpu_custom_call.1} parent=95 // pred_check_branch
          %1206 = sbr.rel (%p1204) target = $region100
        $region99: #{tpu_custom_call.1} parent=95 // pred_region
          %s1207 = sand.u32 %s276, 1
          %s1208 = scalar_lea.sflag [#allocation4], %s1207
          %s1209 = sand.u32 %s276, 1
          %s1210 = smul.addr %s1209, 16
          %s1211 = scalar_lea.vmem [#allocation13], %s1210
          %1212 = dma.done %s1208, 256
        $region100: #{tpu_custom_call.1} parent=95 // pred_fallthru
          _
      $region96: #{tpu_custom_call.1} parent=5 // pred_fallthru
        _
    $region6: #{tpu_custom_call.1} parent=1 // loop_footer
      %s30 = sadd.s32 1, %s26
    $region7: #{tpu_custom_call.1} parent=1 // loop_footer_branch
      %25 = sbr.rel target = $region3
    $region8: #{tpu_custom_call.1} parent=1 // loop_exit
      _
    %1213 = vsyncpa [#allocation3], 1
    %s1214 = scalar_lea.sflag [#allocation3], 1
    %1215 = vsyncpa %s1214, 1
    %1216 = vsyncpa [#allocation6], 1
    %1217 = vsyncpa [#allocation9], 1
    %1218 = vsyncpa [#allocation12], 1
    %1219 = vsyncpa [#allocation4], 1
    %s1220 = scalar_lea.sflag [#allocation4], 1
    %1221 = vsyncpa %s1220, 1

// kernel: tpu_custom_call.1
$region0: #{tpu_custom_call.1}
  #allocation0 [shape = 'u32[]', space=smem, size = 0x4, offset = 0x4, fixed_abs, tag = 'smem constant byte address 0x4 - core index']
  #allocation1 [shape = 'u32[144,128]{1,0:T(1,128)}', space=vmem, size = 0x12000, scoped, tag = 'internal scratch']
  %s0 = inlined_call_operand.hbm [shape: bf16[2,16,128], index: 0, kind: input, shape index: {}]
  %s1 = inlined_call_operand.hbm [shape: bf16[128,128], index: 1, kind: input, shape index: {}]
  %s2 = inlined_call_operand.vmem [shape: f32[1,128], index: 2, kind: input, shape index: {}]
  %s3 = inlined_call_operand.hbm [shape: bf16[128,128], index: 3, kind: input, shape index: {}]
  %s4 = inlined_call_operand.vmem [shape: f32[1,128], index: 4, kind: input, shape index: {}]
  %s5 = inlined_call_operand.hbm [shape: bf16[128,128], index: 5, kind: input, shape index: {}]
  %s6 = inlined_call_operand.vmem [shape: f32[1,128], index: 6, kind: input, shape index: {}]
  %s7 = inlined_call_operand.hbm [shape: bf16[128,128], index: 7, kind: input, shape index: {}]
  %s8 = inlined_call_operand.vmem [shape: f32[1,128], index: 8, kind: input, shape index: {}]
  %s9 = inlined_call_operand.hbm [shape: bf16[128,128], index: 9, kind: input, shape index: {}]
  %s10 = inlined_call_operand.vmem [shape: f32[1,128], index: 10, kind: input, shape index: {}]
  %s11 = inlined_call_operand.hbm [shape: f32[2,16,128], index: 11, kind: output, shape index: {}]
  %s12 = sld [smem:[#allocation0]]
  $region101: #{tpu_custom_call.1} parent=0
    _
  %s14 = ssub.s32 1, %s12
  %s15 = scalar_select 0, %s14, %s12
  $region1: #{tpu_custom_call.1} parent=0
    #allocation2 [shape = 'u8[8192]{0}', space=vmem, size = 0x2000, scoped, tag = 'input window, operand 0']
    #allocation3 [shape = 's32[2]{0}', space=sflag, size = 0x8, scoped, tag = 'scoped memory for tpu_custom_call.1']
    #allocation4 [shape = 's32[2]{0}', space=sflag, size = 0x8, scoped, tag = 'scoped memory for tpu_custom_call.1']
    #allocation5 [shape = 'u8[32768]{0}', space=vmem, size = 0x8000, scoped, tag = 'input window, operand 1, single buffered']
    #allocation6 [shape = 's32[1]{0}', space=sflag, size = 0x4, scoped, tag = 'scoped memory for tpu_custom_call.1']
    #allocation7 [shape = 'u8[32768]{0}', space=vmem, size = 0x8000, scoped, tag = 'input window, operand 3, single buffered']
    #allocation8 [shape = 'u8[32768]{0}', space=vmem, size = 0x8000, scoped, tag = 'input window, operand 5, single buffered']
    #allocation9 [shape = 's32[1]{0}', space=sflag, size = 0x4, scoped, tag = 'scoped memory for tpu_custom_call.1']
    #allocation10 [shape = 'u8[32768]{0}', space=vmem, size = 0x8000, scoped, tag = 'input window, operand 7, single buffered']
    #allocation11 [shape = 'u8[32768]{0}', space=vmem, size = 0x8000, scoped, tag = 'input window, operand 9, single buffered']
    #allocation12 [shape = 's32[1]{0}', space=sflag, size = 0x4, scoped, tag = 'scoped memory for tpu_custom_call.1']
    #allocation13 [shape = 'u8[16384]{0}', space=vmem, size = 0x4000, scoped, tag = 'output window, operand 0']
    %16 = vsyncpa [#allocation3], 0
    %s17 = scalar_lea.sflag [#allocation3], 1
    %18 = vsyncpa %s17, 0
    %19 = vsyncpa [#allocation6], 0
    %20 = vsyncpa [#allocation9], 0
    %21 = vsyncpa [#allocation12], 0
    %22 = vsyncpa [#allocation4], 0
    %s23 = scalar_lea.sflag [#allocation4], 1
    %24 = vsyncpa %s23, 0
    loop: start=0, step=1, limit=4
    $region2: #{tpu_custom_call.1} parent=1 // loop_pre_header
      _
    $region3: #{tpu_custom_call.1} parent=1 // loop_header
      %s26 = sphi 0, %s30
      %p27 = scmp.ge.s32.totalorder %s26, 4
      %s36 = sphi 0, %s38
      %s39 = sphi 0, %s36
      %s40 = sphi 0, %s39
      %s56 = sphi 0, %s40
      %s60 = sphi 0, %s60
      %s62 = sphi 0, %s60
      %s63 = sphi 0, %s62
      %s77 = sphi 0, %s63
      %s81 = sphi 0, %s81
      %s83 = sphi 0, %s81
      %s84 = sphi 0, %s83
      %s98 = sphi 0, %s84
      %s102 = sphi 0, %s102
      %s104 = sphi 0, %s102
      %s105 = sphi 0, %s104
      %s119 = sphi 0, %s105
      %s123 = sphi 0, %s123
      %s125 = sphi 0, %s123
      %s126 = sphi 0, %s125
      %s140 = sphi 0, %s126
      %s144 = sphi 0, %s144
      %s146 = sphi 0, %s144
      %s147 = sphi 0, %s146
      %s161 = sphi 0, %s147
      %s165 = sphi 0, %s165
      %s167 = sphi 0, %s165
      %s168 = sphi 0, %s167
      %s182 = sphi 0, %s168
      %s186 = sphi 0, %s186
      %s188 = sphi 0, %s186
      %s189 = sphi 0, %s188
      %s203 = sphi 0, %s189
      %s207 = sphi 0, %s207
      %s209 = sphi 0, %s207
      %s210 = sphi 0, %s209
      %s224 = sphi 0, %s210
      %s228 = sphi 0, %s228
      %s230 = sphi 0, %s228
      %s231 = sphi 0, %s230
      %s245 = sphi 0, %s231
      %s249 = sphi 0, %s249
      %s251 = sphi 0, %s249
      %s252 = sphi 0, %s251
      %s266 = sphi 0, %s252
      %s272 = sphi 0, %s274
      %s275 = sphi 0, %s272
      %s276 = sphi 0, %s275
      %s292 = sphi 0, %s276
    $region4: #{tpu_custom_call.1} parent=1 // loop_header_branch
      %29 = sbr.rel (%p27) target = $region8
    $region5: #{tpu_custom_call.1} parent=1 // loop_body
      %s31 = ssub.s32 %s26, 1
      %s32 = ssub.s32 %s26, 2
      %s33 = sadd.s32 %s26, 1
      %s34 = ssub.s32 %s26, %s33
      %p35 = scmp.eq.s32.totalorder %s34, 0
      %s37 = sadd.s32 %s36, 1
      %s38 = scalar_select %p35, %s36, %s37
      %p41 = pneg %p35
      %p42 = scmp.eq.s32.totalorder %s26, 1
      %p43 = por %p41, %p42
      %p44 = scmp.ne.s32.totalorder %s36, %s39
      %p45 = scmp.eq.s32.totalorder %s26, 0
      %p46 = por %p44, %p45
      %p47 = scmp.ne.s32.totalorder %s36, %s39
      %p48 = scmp.eq.s32.totalorder %s31, 1
      %p49 = por %p47, %p48
      %p50 = scmp.ne.s32.totalorder %s39, %s40
      %p51 = scmp.eq.s32.totalorder %s31, 0
      %p52 = por %p50, %p51
      %p53 = scmp.ne.s32.totalorder %s39, %s40
      %p54 = scmp.eq.s32.totalorder %s32, 1
      %p55 = por %p53, %p54
      %p57 = scmp.ne.s32.totalorder %s40, %s56
      %p58 = scmp.eq.s32.totalorder %s32, 0
      %p59 = por %p57, %p58
      %s61 = sadd.s32 %s60, 1
      %p64 = scmp.eq.s32.totalorder %s26, 1
      %p65 = scmp.ne.s32.totalorder %s60, %s62
      %p66 = scmp.eq.s32.totalorder %s26, 0
      %p67 = por %p65, %p66
      %p68 = scmp.ne.s32.totalorder %s60, %s62
      %p69 = scmp.eq.s32.totalorder %s31, 1
      %p70 = por %p68, %p69
      %p71 = scmp.ne.s32.totalorder %s62, %s63
      %p72 = scmp.eq.s32.totalorder %s31, 0
      %p73 = por %p71, %p72
      %p74 = scmp.ne.s32.totalorder %s62, %s63
      %p75 = scmp.eq.s32.totalorder %s32, 1
      %p76 = por %p74, %p75
      %p78 = scmp.ne.s32.totalorder %s63, %s77
      %p79 = scmp.eq.s32.totalorder %s32, 0
      %p80 = por %p78, %p79
      %s82 = sadd.s32 %s81, 1
      %p85 = scmp.eq.s32.totalorder %s26, 1
      %p86 = scmp.ne.s32.totalorder %s81, %s83
      %p87 = scmp.eq.s32.totalorder %s26, 0
      %p88 = por %p86, %p87
      %p89 = scmp.ne.s32.totalorder %s81, %s83
      %p90 = scmp.eq.s32.totalorder %s31, 1
      %p91 = por %p89, %p90
      %p92 = scmp.ne.s32.totalorder %s83, %s84
      %p93 = scmp.eq.s32.totalorder %s31, 0
      %p94 = por %p92, %p93
      %p95 = scmp.ne.s32.totalorder %s83, %s84
      %p96 = scmp.eq.s32.totalorder %s32, 1
      %p97 = por %p95, %p96
      %p99 = scmp.ne.s32.totalorder %s84, %s98
      %p100 = scmp.eq.s32.totalorder %s32, 0
      %p101 = por %p99, %p100
      %s103 = sadd.s32 %s102, 1
      %p106 = scmp.eq.s32.totalorder %s26, 1
      %p107 = scmp.ne.s32.totalorder %s102, %s104
      %p108 = scmp.eq.s32.totalorder %s26, 0
      %p109 = por %p107, %p108
      %p110 = scmp.ne.s32.totalorder %s102, %s104
      %p111 = scmp.eq.s32.totalorder %s31, 1
      %p112 = por %p110, %p111
      %p113 = scmp.ne.s32.totalorder %s104, %s105
      %p114 = scmp.eq.s32.totalorder %s31, 0
      %p115 = por %p113, %p114
      %p116 = scmp.ne.s32.totalorder %s104, %s105
      %p117 = scmp.eq.s32.totalorder %s32, 1
      %p118 = por %p116, %p117
      %p120 = scmp.ne.s32.totalorder %s105, %s119
      %p121 = scmp.eq.s32.totalorder %s32, 0
      %p122 = por %p120, %p121
      %s124 = sadd.s32 %s123, 1
      %p127 = scmp.eq.s32.totalorder %s26, 1
      %p128 = scmp.ne.s32.totalorder %s123, %s125
      %p129 = scmp.eq.s32.totalorder %s26, 0
      %p130 = por %p128, %p129
      %p131 = scmp.ne.s32.totalorder %s123, %s125
      %p132 = scmp.eq.s32.totalorder %s31, 1
      %p133 = por %p131, %p132
      %p134 = scmp.ne.s32.totalorder %s125, %s126
      %p135 = scmp.eq.s32.totalorder %s31, 0
      %p136 = por %p134, %p135
      %p137 = scmp.ne.s32.totalorder %s125, %s126
      %p138 = scmp.eq.s32.totalorder %s32, 1
      %p139 = por %p137, %p138
      %p141 = scmp.ne.s32.totalorder %s126, %s140
      %p142 = scmp.eq.s32.totalorder %s32, 0
      %p143 = por %p141, %p142
      %s145 = sadd.s32 %s144, 1
      %p148 = scmp.eq.s32.totalorder %s26, 1
      %p149 = scmp.ne.s32.totalorder %s144, %s146
      %p150 = scmp.eq.s32.totalorder %s26, 0
      %p151 = por %p149, %p150
      %p152 = scmp.ne.s32.totalorder %s144, %s146
      %p153 = scmp.eq.s32.totalorder %s31, 1
      %p154 = por %p152, %p153
      %p155 = scmp.ne.s32.totalorder %s146, %s147
      %p156 = scmp.eq.s32.totalorder %s31, 0
      %p157 = por %p155, %p156
      %p158 = scmp.ne.s32.totalorder %s146, %s147
      %p159 = scmp.eq.s32.totalorder %s32, 1
      %p160 = por %p158, %p159
      %p162 = scmp.ne.s32.totalorder %s147, %s161
      %p163 = scmp.eq.s32.totalorder %s32, 0
      %p164 = por %p162, %p163
      %s166 = sadd.s32 %s165, 1
      %p169 = scmp.eq.s32.totalorder %s26, 1
      %p170 = scmp.ne.s32.totalorder %s165, %s167
      %p171 = scmp.eq.s32.totalorder %s26, 0
      %p172 = por %p170, %p171
      %p173 = scmp.ne.s32.totalorder %s165, %s167
      %p174 = scmp.eq.s32.totalorder %s31, 1
      %p175 = por %p173, %p174
      %p176 = scmp.ne.s32.totalorder %s167, %s168
      %p177 = scmp.eq.s32.totalorder %s31, 0
      %p178 = por %p176, %p177
      %p179 = scmp.ne.s32.totalorder %s167, %s168
      %p180 = scmp.eq.s32.totalorder %s32, 1
      %p181 = por %p179, %p180
      %p183 = scmp.ne.s32.totalorder %s168, %s182
      %p184 = scmp.eq.s32.totalorder %s32, 0
      %p185 = por %p183, %p184
      %s187 = sadd.s32 %s186, 1
      %p190 = scmp.eq.s32.totalorder %s26, 1
      %p191 = scmp.ne.s32.totalorder %s186, %s188
      %p192 = scmp.eq.s32.totalorder %s26, 0
      %p193 = por %p191, %p192
      %p194 = scmp.ne.s32.totalorder %s186, %s188
      %p195 = scmp.eq.s32.totalorder %s31, 1
      %p196 = por %p194, %p195
      %p197 = scmp.ne.s32.totalorder %s188, %s189
      %p198 = scmp.eq.s32.totalorder %s31, 0
      %p199 = por %p197, %p198
      %p200 = scmp.ne.s32.totalorder %s188, %s189
      %p201 = scmp.eq.s32.totalorder %s32, 1
      %p202 = por %p200, %p201
      %p204 = scmp.ne.s32.totalorder %s189, %s203
      %p205 = scmp.eq.s32.totalorder %s32, 0
      %p206 = por %p204, %p205
      %s208 = sadd.s32 %s207, 1
      %p211 = scmp.eq.s32.totalorder %s26, 1
      %p212 = scmp.ne.s32.totalorder %s207, %s209
      %p213 = scmp.eq.s32.totalorder %s26, 0
      %p214 = por %p212, %p213
      %p215 = scmp.ne.s32.totalorder %s207, %s209
      %p216 = scmp.eq.s32.totalorder %s31, 1
      %p217 = por %p215, %p216
      %p218 = scmp.ne.s32.totalorder %s209, %s210
      %p219 = scmp.eq.s32.totalorder %s31, 0
      %p220 = por %p218, %p219
      %p221 = scmp.ne.s32.totalorder %s209, %s210
      %p222 = scmp.eq.s32.totalorder %s32, 1
      %p223 = por %p221, %p222
      %p225 = scmp.ne.s32.totalorder %s210, %s224
      %p226 = scmp.eq.s32.totalorder %s32, 0
      %p227 = por %p225, %p226
      %s229 = sadd.s32 %s228, 1
      %p232 = scmp.eq.s32.totalorder %s26, 1
      %p233 = scmp.ne.s32.totalorder %s228, %s230
      %p234 = scmp.eq.s32.totalorder %s26, 0
      %p235 = por %p233, %p234
      %p236 = scmp.ne.s32.totalorder %s228, %s230
      %p237 = scmp.eq.s32.totalorder %s31, 1
      %p238 = por %p236, %p237
      %p239 = scmp.ne.s32.totalorder %s230, %s231
      %p240 = scmp.eq.s32.totalorder %s31, 0
      %p241 = por %p239, %p240
      %p242 = scmp.ne.s32.totalorder %s230, %s231
      %p243 = scmp.eq.s32.totalorder %s32, 1
      %p244 = por %p242, %p243
      %p246 = scmp.ne.s32.totalorder %s231, %s245
      %p247 = scmp.eq.s32.totalorder %s32, 0
      %p248 = por %p246, %p247
      %s250 = sadd.s32 %s249, 1
      %p253 = scmp.eq.s32.totalorder %s26, 1
      %p254 = scmp.ne.s32.totalorder %s249, %s251
      %p255 = scmp.eq.s32.totalorder %s26, 0
      %p256 = por %p254, %p255
      %p257 = scmp.ne.s32.totalorder %s249, %s251
      %p258 = scmp.eq.s32.totalorder %s31, 1
      %p259 = por %p257, %p258
      %p260 = scmp.ne.s32.totalorder %s251, %s252
      %p261 = scmp.eq.s32.totalorder %s31, 0
      %p262 = por %p260, %p261
      %p263 = scmp.ne.s32.totalorder %s251, %s252
      %p264 = scmp.eq.s32.totalorder %s32, 1
      %p265 = por %p263, %p264
      %p267 = scmp.ne.s32.totalorder %s252, %s266
      %p268 = scmp.eq.s32.totalorder %s32, 0
      %p269 = por %p267, %p268
      %s270 = ssub.s32 %s26, %s33
      %p271 = scmp.eq.s32.totalorder %s270, 0
      %s273 = sadd.s32 %s272, 1
      %s274 = scalar_select %p271, %s272, %s273
      %p277 = pneg %p271
      %p278 = scmp.eq.s32.totalorder %s26, 1
      %p279 = por %p277, %p278
      %p280 = scmp.ne.s32.totalorder %s272, %s275
      %p281 = scmp.eq.s32.totalorder %s26, 0
      %p282 = por %p280, %p281
      %p283 = scmp.ne.s32.totalorder %s272, %s275
      %p284 = scmp.eq.s32.totalorder %s31, 1
      %p285 = por %p283, %p284
      %p286 = scmp.ne.s32.totalorder %s275, %s276
      %p287 = scmp.eq.s32.totalorder %s31, 0
      %p288 = por %p286, %p287
      %p289 = scmp.ne.s32.totalorder %s275, %s276
      %p290 = scmp.eq.s32.totalorder %s32, 1
      %p291 = por %p289, %p290
      %p293 = scmp.ne.s32.totalorder %s276, %s292
      %p294 = scmp.eq.s32.totalorder %s32, 0
      %p295 = por %p293, %p294
      %p296 = scmp.le.s32.totalorder 1, %s26
      %p297 = scmp.lt.s32.totalorder %s26, 3
      %p298 = pnand %p296, %p297
      %p299 = pneg %p298
      // Predicated region
      $region9: #{tpu_custom_call.1} parent=5 // pred_check
        _
      $region10: #{tpu_custom_call.1} parent=5 // pred_check_branch
        %301 = sbr.rel (%p298) target = $region12
      $region11: #{tpu_custom_call.1} parent=5 // pred_region
        %s302 = ssub.s32 %s26, 1
        // Predicated region
        $region13: #{tpu_custom_call.1} parent=11 // pred_check
          %p303 = pneg %p73
        $region14: #{tpu_custom_call.1} parent=11 // pred_check_branch
          %305 = sbr.rel (%p303) target = $region16
        $region15: #{tpu_custom_call.1} parent=11 // pred_region
          %s307 = ssub.s32 1024, 1024
          %308 = vsyncadd [#allocation6], %s307
          %s309 = sshll.u32 [#allocation5], 4
          %s310 = int_to_ptr.vmem [resolvable:$true] %s309
          %315 = dma.hbm_to_vmem [thread:$0]  %s1, 1024, %s310, [#allocation6], 64, 64, 4
        $region16: #{tpu_custom_call.1} parent=11 // pred_fallthru
          _
        // Predicated region
        $region17: #{tpu_custom_call.1} parent=11 // pred_check
          %p316 = pneg %p94
        $region18: #{tpu_custom_call.1} parent=11 // pred_check_branch
          %318 = sbr.rel (%p316) target = $region20
        $region19: #{tpu_custom_call.1} parent=11 // pred_region
          _
        $region20: #{tpu_custom_call.1} parent=11 // pred_fallthru
          _
        // Predicated region
        $region21: #{tpu_custom_call.1} parent=11 // pred_check
          %p319 = pneg %p115
        $region22: #{tpu_custom_call.1} parent=11 // pred_check_branch
          %321 = sbr.rel (%p319) target = $region24
        $region23: #{tpu_custom_call.1} parent=11 // pred_region
          %s323 = ssub.s32 1024, 1024
          %324 = vsyncadd [#allocation6], %s323
          %s325 = sshll.u32 [#allocation7], 4
          %s326 = int_to_ptr.vmem [resolvable:$true] %s325
          %331 = dma.hbm_to_vmem [thread:$0]  %s3, 1024, %s326, [#allocation6], 64, 64, 4
        $region24: #{tpu_custom_call.1} parent=11 // pred_fallthru
          _
        // Predicated region
        $region25: #{tpu_custom_call.1} parent=11 // pred_check
          %p332 = pneg %p136
        $region26: #{tpu_custom_call.1} parent=11 // pred_check_branch
          %334 = sbr.rel (%p332) target = $region28
        $region27: #{tpu_custom_call.1} parent=11 // pred_region
          _
        $region28: #{tpu_custom_call.1} parent=11 // pred_fallthru
          _
        // Predicated region
        $region29: #{tpu_custom_call.1} parent=11 // pred_check
          %p335 = pneg %p157
        $region30: #{tpu_custom_call.1} parent=11 // pred_check_branch
          %337 = sbr.rel (%p335) target = $region32
        $region31: #{tpu_custom_call.1} parent=11 // pred_region
          %s339 = ssub.s32 1024, 1024
          %340 = vsyncadd [#allocation9], %s339
          %s341 = sshll.u32 [#allocation8], 4
          %s342 = int_to_ptr.vmem [resolvable:$true] %s341
          %347 = dma.hbm_to_vmem [thread:$0]  %s5, 1024, %s342, [#allocation9], 64, 64, 4
        $region32: #{tpu_custom_call.1} parent=11 // pred_fallthru
          _
        // Predicated region
        $region33: #{tpu_custom_call.1} parent=11 // pred_check
          %p348 = pneg %p178
        $region34: #{tpu_custom_call.1} parent=11 // pred_check_branch
          %350 = sbr.rel (%p348) target = $region36
        $region35: #{tpu_custom_call.1} parent=11 // pred_region
          _
        $region36: #{tpu_custom_call.1} parent=11 // pred_fallthru
          _
        // Predicated region
        $region37: #{tpu_custom_call.1} parent=11 // pred_check
          %p351 = pneg %p199
        $region38: #{tpu_custom_call.1} parent=11 // pred_check_branch
          %353 = sbr.rel (%p351) target = $region40
        $region39: #{tpu_custom_call.1} parent=11 // pred_region
          %s355 = ssub.s32 1024, 1024
          %356 = vsyncadd [#allocation9], %s355
          %s357 = sshll.u32 [#allocation10], 4
          %s358 = int_to_ptr.vmem [resolvable:$true] %s357
          %363 = dma.hbm_to_vmem [thread:$0]  %s7, 1024, %s358, [#allocation9], 64, 64, 4
        $region40: #{tpu_custom_call.1} parent=11 // pred_fallthru
          _
        // Predicated region
        $region41: #{tpu_custom_call.1} parent=11 // pred_check
          %p364 = pneg %p220
        $region42: #{tpu_custom_call.1} parent=11 // pred_check_branch
          %366 = sbr.rel (%p364) target = $region44
        $region43: #{tpu_custom_call.1} parent=11 // pred_region
          _
        $region44: #{tpu_custom_call.1} parent=11 // pred_fallthru
          _
        // Predicated region
        $region45: #{tpu_custom_call.1} parent=11 // pred_check
          %p367 = pneg %p241
        $region46: #{tpu_custom_call.1} parent=11 // pred_check_branch
          %369 = sbr.rel (%p367) target = $region48
        $region47: #{tpu_custom_call.1} parent=11 // pred_region
          %s371 = ssub.s32 1024, 1024
          %372 = vsyncadd [#allocation12], %s371
          %s373 = sshll.u32 [#allocation11], 4
          %s374 = int_to_ptr.vmem [resolvable:$true] %s373
          %379 = dma.hbm_to_vmem [thread:$0]  %s9, 1024, %s374, [#allocation12], 64, 64, 4
        $region48: #{tpu_custom_call.1} parent=11 // pred_fallthru
          _
        // Predicated region
        $region49: #{tpu_custom_call.1} parent=11 // pred_check
          %p380 = pneg %p262
        $region50: #{tpu_custom_call.1} parent=11 // pred_check_branch
          %382 = sbr.rel (%p380) target = $region52
        $region51: #{tpu_custom_call.1} parent=11 // pred_region
          _
        $region52: #{tpu_custom_call.1} parent=11 // pred_fallthru
          _
      $region12: #{tpu_custom_call.1} parent=5 // pred_fallthru
        _
      %p383 = scmp.lt.s32.totalorder %s26, 2
      // Predicated region
      $region53: #{tpu_custom_call.1} parent=5 // pred_check
        %p384 = pneg %p383
      $region54: #{tpu_custom_call.1} parent=5 // pred_check_branch
        %386 = sbr.rel (%p384) target = $region56
      $region55: #{tpu_custom_call.1} parent=5 // pred_region
        // Predicated region
        $region57: #{tpu_custom_call.1} parent=55 // pred_check
          %p387 = pneg %p46
        $region58: #{tpu_custom_call.1} parent=55 // pred_check_branch
          %389 = sbr.rel (%p387) target = $region60
        $region59: #{tpu_custom_call.1} parent=55 // pred_region
          %s390 = sand.u32 %s36, 1
          %s391 = scalar_lea.sflag [#allocation3], %s390
          %s392 = sand.u32 %s36, 1
          %s393 = smul.addr %s392, 8
          %s394 = scalar_lea.vmem [#allocation2], %s393
          %s396 = ssub.s32 128, 128
          %397 = vsyncadd %s391, %s396
          %s398 = smul.addr %s26, 2
          %s399 = smul.addr %s398, 64
          %s400 = scalar_lea.hbm %s0, %s399
          %s401 = sshll.u32 %s394, 4
          %s402 = int_to_ptr.vmem [resolvable:$true] %s401
          %407 = dma.hbm_to_vmem [thread:$0]  %s400, 128, %s402, %s391, 64, 64, 4
        $region60: #{tpu_custom_call.1} parent=55 // pred_fallthru
          _
      $region56: #{tpu_custom_call.1} parent=5 // pred_fallthru
        _
      %p408 = scmp.le.s32.totalorder 1, %s26
      %p409 = scmp.lt.s32.totalorder %s26, 3
      %p410 = pnand %p408, %p409
      %p411 = pneg %p410
      // Predicated region
      $region61: #{tpu_custom_call.1} parent=5 // pred_check
        _
      $region62: #{tpu_custom_call.1} parent=5 // pred_check_branch
        %413 = sbr.rel (%p410) target = $region64
      $region63: #{tpu_custom_call.1} parent=5 // pred_region
        %s414 = ssub.s32 %s26, 1
        %s415 = sand.u32 %s39, 1
        %s416 = scalar_lea.sflag [#allocation3], %s415
        %s417 = sand.u32 %s39, 1
        %s418 = smul.addr %s417, 8
        %s419 = scalar_lea.vmem [#allocation2], %s418
        // Predicated region
        $region65: #{tpu_custom_call.1} parent=63 // pred_check
          %p420 = pneg %p52
        $region66: #{tpu_custom_call.1} parent=63 // pred_check_branch
          %422 = sbr.rel (%p420) target = $region68
        $region67: #{tpu_custom_call.1} parent=63 // pred_region
          %423 = dma.done %s416, 128
        $region68: #{tpu_custom_call.1} parent=63 // pred_fallthru
          _
        // Predicated region
        $region69: #{tpu_custom_call.1} parent=63 // pred_check
          %p424 = pneg %p73
        $region70: #{tpu_custom_call.1} parent=63 // pred_check_branch
          %426 = sbr.rel (%p424) target = $region72
        $region71: #{tpu_custom_call.1} parent=63 // pred_region
          %427 = dma.done [#allocation6], 1024
        $region72: #{tpu_custom_call.1} parent=63 // pred_fallthru
          _
        // Predicated region
        $region73: #{tpu_custom_call.1} parent=63 // pred_check
          %p428 = pneg %p115
        $region74: #{tpu_custom_call.1} parent=63 // pred_check_branch
          %430 = sbr.rel (%p428) target = $region76
        $region75: #{tpu_custom_call.1} parent=63 // pred_region
          %431 = dma.done [#allocation6], 1024
        $region76: #{tpu_custom_call.1} parent=63 // pred_fallthru
          _
        // Predicated region
        $region77: #{tpu_custom_call.1} parent=63 // pred_check
          %p432 = pneg %p157
        $region78: #{tpu_custom_call.1} parent=63 // pred_check_branch
          %434 = sbr.rel (%p432) target = $region80
        $region79: #{tpu_custom_call.1} parent=63 // pred_region
          %435 = dma.done [#allocation9], 1024
        $region80: #{tpu_custom_call.1} parent=63 // pred_fallthru
          _
        // Predicated region
        $region81: #{tpu_custom_call.1} parent=63 // pred_check
          %p436 = pneg %p199
        $region82: #{tpu_custom_call.1} parent=63 // pred_check_branch
          %438 = sbr.rel (%p436) target = $region84
        $region83: #{tpu_custom_call.1} parent=63 // pred_region
          %439 = dma.done [#allocation9], 1024
        $region84: #{tpu_custom_call.1} parent=63 // pred_fallthru
          _
        // Predicated region
        $region85: #{tpu_custom_call.1} parent=63 // pred_check
          %p440 = pneg %p241
        $region86: #{tpu_custom_call.1} parent=63 // pred_check_branch
          %442 = sbr.rel (%p440) target = $region88
        $region87: #{tpu_custom_call.1} parent=63 // pred_region
          %443 = dma.done [#allocation12], 1024
        $region88: #{tpu_custom_call.1} parent=63 // pred_fallthru
          _
        %s444 = sand.u32 %s39, 1
        %s445 = scalar_lea.sflag [#allocation3], %s444
        %s446 = sand.u32 %s39, 1
        %s447 = smul.addr %s446, 8
        %s448 = scalar_lea.vmem [#allocation2], %s447
        %p449 = pneg %p52
        %p450 = pneg %p49
        %p451 = pneg %p73
        %p452 = pneg %p70
        %p453 = pneg %p94
        %p454 = pneg %p91
        %p455 = pneg %p115
        %p456 = pneg %p112
        %p457 = pneg %p136
        %p458 = pneg %p133
        %p459 = pneg %p157
        %p460 = pneg %p154
        %p461 = pneg %p178
        %p462 = pneg %p175
        %p463 = pneg %p199
        %p464 = pneg %p196
        %p465 = pneg %p220
        %p466 = pneg %p217
        %p467 = pneg %p241
        %p468 = pneg %p238
        %p469 = pneg %p262
        %p470 = pneg %p259
        %p471 = pneg %p288
        %p472 = pneg %p285
        %s473 = sand.u32 %s275, 1
        %s474 = scalar_lea.sflag [#allocation4], %s473
        %s475 = sand.u32 %s275, 1
        %s476 = smul.addr %s475, 16
        %s477 = scalar_lea.vmem [#allocation13], %s476
        %v479 = vld [vmem:[%s419] sm:$0xf]
        %v480 = vld [vmem:[%s419 + $0x4] sm:$0xf]
        %v481 = vld [vmem:[#allocation5] sm:$0xf]
        %v482 = vld [vmem:[#allocation5 + $0x4] sm:$0xf]
        %v483 = vld [vmem:[#allocation5 + $0x8] sm:$0xf]
        %v484 = vld [vmem:[#allocation5 + $0xc] sm:$0xf]
        %v485 = vld [vmem:[#allocation5 + $0x10] sm:$0xf]
        %v486 = vld [vmem:[#allocation5 + $0x14] sm:$0xf]
        %v487 = vld [vmem:[#allocation5 + $0x18] sm:$0xf]
        %v488 = vld [vmem:[#allocation5 + $0x1c] sm:$0xf]
        %v489 = vld [vmem:[#allocation5 + $0x20] sm:$0xf]
        %v490 = vld [vmem:[#allocation5 + $0x24] sm:$0xf]
        %v491 = vld [vmem:[#allocation5 + $0x28] sm:$0xf]
        %v492 = vld [vmem:[#allocation5 + $0x2c] sm:$0xf]
        %v493 = vld [vmem:[#allocation5 + $0x30] sm:$0xf]
        %v494 = vld [vmem:[#allocation5 + $0x34] sm:$0xf]
        %v495 = vld [vmem:[#allocation5 + $0x38] sm:$0xf]
        %v496 = vld [vmem:[#allocation5 + $0x3c] sm:$0xf]
        %v497 = vld [vmem:[#allocation7] sm:$0xf]
        %v498 = vld [vmem:[#allocation7 + $0x4] sm:$0xf]
        %v499 = vld [vmem:[#allocation7 + $0x8] sm:$0xf]
        %v500 = vld [vmem:[#allocation7 + $0xc] sm:$0xf]
        %v501 = vld [vmem:[#allocation7 + $0x10] sm:$0xf]
        %v502 = vld [vmem:[#allocation7 + $0x14] sm:$0xf]
        %v503 = vld [vmem:[#allocation7 + $0x18] sm:$0xf]
        %v504 = vld [vmem:[#allocation7 + $0x1c] sm:$0xf]
        %v505 = vld [vmem:[#allocation7 + $0x20] sm:$0xf]
        %v506 = vld [vmem:[#allocation7 + $0x24] sm:$0xf]
        %v507 = vld [vmem:[#allocation7 + $0x28] sm:$0xf]
        %v508 = vld [vmem:[#allocation7 + $0x2c] sm:$0xf]
        %v509 = vld [vmem:[#allocation7 + $0x30] sm:$0xf]
        %v510 = vld [vmem:[#allocation7 + $0x34] sm:$0xf]
        %v511 = vld [vmem:[#allocation7 + $0x38] sm:$0xf]
        %v512 = vld [vmem:[#allocation7 + $0x3c] sm:$0xf]
        %v513 = vld [vmem:[#allocation8] sm:$0xf]
        %v514 = vld [vmem:[#allocation8 + $0x4] sm:$0xf]
        %v515 = vld [vmem:[#allocation8 + $0x8] sm:$0xf]
        %v516 = vld [vmem:[#allocation8 + $0xc] sm:$0xf]
        %v517 = vld [vmem:[#allocation8 + $0x10] sm:$0xf]
        %v518 = vld [vmem:[#allocation8 + $0x14] sm:$0xf]
        %v519 = vld [vmem:[#allocation8 + $0x18] sm:$0xf]
        %v520 = vld [vmem:[#allocation8 + $0x1c] sm:$0xf]
        %v521 = vld [vmem:[#allocation8 + $0x20] sm:$0xf]
        %v522 = vld [vmem:[#allocation8 + $0x24] sm:$0xf]
        %v523 = vld [vmem:[#allocation8 + $0x28] sm:$0xf]
        %v524 = vld [vmem:[#allocation8 + $0x2c] sm:$0xf]
        %v525 = vld [vmem:[#allocation8 + $0x30] sm:$0xf]
        %v526 = vld [vmem:[#allocation8 + $0x34] sm:$0xf]
        %v527 = vld [vmem:[#allocation8 + $0x38] sm:$0xf]
        %v528 = vld [vmem:[#allocation8 + $0x3c] sm:$0xf]
        %v529 = vld [vmem:[#allocation10] sm:$0xf]
        %v530 = vld [vmem:[#allocation10 + $0x4] sm:$0xf]
        %v531 = vld [vmem:[#allocation10 + $0x8] sm:$0xf]
        %v532 = vld [vmem:[#allocation10 + $0xc] sm:$0xf]
        %v533 = vld [vmem:[#allocation10 + $0x10] sm:$0xf]
        %v534 = vld [vmem:[#allocation10 + $0x14] sm:$0xf]
        %v535 = vld [vmem:[#allocation10 + $0x18] sm:$0xf]
        %v536 = vld [vmem:[#allocation10 + $0x1c] sm:$0xf]
        %v537 = vld [vmem:[#allocation10 + $0x20] sm:$0xf]
        %v538 = vld [vmem:[#allocation10 + $0x24] sm:$0xf]
        %v539 = vld [vmem:[#allocation10 + $0x28] sm:$0xf]
        %v540 = vld [vmem:[#allocation10 + $0x2c] sm:$0xf]
        %v541 = vld [vmem:[#allocation10 + $0x30] sm:$0xf]
        %v542 = vld [vmem:[#allocation10 + $0x34] sm:$0xf]
        %v543 = vld [vmem:[#allocation10 + $0x38] sm:$0xf]
        %v544 = vld [vmem:[#allocation10 + $0x3c] sm:$0xf]
        %v545 = vld [vmem:[#allocation11] sm:$0xf]
        %v546 = vld [vmem:[#allocation11 + $0x4] sm:$0xf]
        %v547 = vld [vmem:[#allocation11 + $0x8] sm:$0xf]
        %v548 = vld [vmem:[#allocation11 + $0xc] sm:$0xf]
        %v549 = vld [vmem:[#allocation11 + $0x10] sm:$0xf]
        %v550 = vld [vmem:[#allocation11 + $0x14] sm:$0xf]
        %v551 = vld [vmem:[#allocation11 + $0x18] sm:$0xf]
        %v552 = vld [vmem:[#allocation11 + $0x1c] sm:$0xf]
        %v553 = vld [vmem:[#allocation11 + $0x20] sm:$0xf]
        %v554 = vld [vmem:[#allocation11 + $0x24] sm:$0xf]
        %v555 = vld [vmem:[#allocation11 + $0x28] sm:$0xf]
        %v556 = vld [vmem:[#allocation11 + $0x2c] sm:$0xf]
        %v557 = vld [vmem:[#allocation11 + $0x30] sm:$0xf]
        %v558 = vld [vmem:[#allocation11 + $0x34] sm:$0xf]
        %v559 = vld [vmem:[#allocation11 + $0x38] sm:$0xf]
        %v560 = vld [vmem:[#allocation11 + $0x3c] sm:$0xf]
        %v561 = vld [vmem:[%s2] sm:$0x1]
        %v562 = vld [vmem:[%s4] sm:$0x1]
        %v563 = vld [vmem:[%s6] sm:$0x1]
        %v564 = vld [vmem:[%s8] sm:$0x1]
        %v565 = vld [vmem:[%s10] sm:$0x1]
        %v567 = vlaneseq
        %v568 = vshrl.u32 %v567, 7
        %v569 = vsub.s32 0, %v568
        %v570 = vrot.slane %v561, %v569
        %v574 = vunpack.c.l.b16 %v479
        %v575 = vunpack.c.l.b16 %v480
        %v576 = vpack.c.b16 %v575, %v574
        %v594 = vunpack.c.l.b16 %v481
        %v595 = vunpack.c.l.b16 %v482
        %v596 = vunpack.c.l.b16 %v483
        %v597 = vunpack.c.l.b16 %v484
        %v598 = vunpack.c.l.b16 %v485
        %v599 = vunpack.c.l.b16 %v486
        %v600 = vunpack.c.l.b16 %v487
        %v601 = vunpack.c.l.b16 %v488
        %v602 = vunpack.c.l.b16 %v489
        %v603 = vunpack.c.l.b16 %v490
        %v604 = vunpack.c.l.b16 %v491
        %v605 = vunpack.c.l.b16 %v492
        %v606 = vunpack.c.l.b16 %v493
        %v607 = vunpack.c.l.b16 %v494
        %v608 = vunpack.c.l.b16 %v495
        %v609 = vunpack.c.l.b16 %v496
        %v610 = vpack.c.b16 %v595, %v594
        %v611 = vpack.c.b16 %v597, %v596
        %v612 = vpack.c.b16 %v599, %v598
        %v613 = vpack.c.b16 %v601, %v600
        %v614 = vpack.c.b16 %v603, %v602
        %v615 = vpack.c.b16 %v605, %v604
        %v616 = vpack.c.b16 %v607, %v606
        %v617 = vpack.c.b16 %v609, %v608
        %626 = vmatprep.subr.bf16.mxu0 0
        %627 = vmatpush1.bf16.msra.mxu0 %v617
        %628 = vmatprep.subr.bf16.mxu0 0
        %629 = vmatpush1.bf16.msra.mxu0 %v616
        %630 = vmatprep.subr.bf16.mxu0 0
        %631 = vmatpush1.bf16.msra.mxu0 %v615
        %632 = vmatprep.subr.bf16.mxu0 0
        %633 = vmatpush1.bf16.msra.mxu0 %v614
        %634 = vmatprep.subr.bf16.mxu0 0
        %635 = vmatpush1.bf16.msra.mxu0 %v613
        %636 = vmatprep.subr.bf16.mxu0 0
        %637 = vmatpush1.bf16.msra.mxu0 %v612
        %638 = vmatprep.subr.bf16.mxu0 0
        %639 = vmatpush1.bf16.msra.mxu0 %v611
        %640 = vmatprep.subr.bf16.mxu0 0
        %641 = vmatpush1.bf16.msra.mxu0 %v610
        %642 = vmatprep.subr.bf16.mxu0 0
        %643 = vmatpush2.bf16.msra.mxu0 0
        %644 = vmatprep.subr.bf16.mxu0 0
        %645 = vmatpush2.bf16.msra.mxu0 0
        %646 = vmatprep.subr.bf16.mxu0 0
        %647 = vmatpush2.bf16.msra.mxu0 0
        %648 = vmatprep.subr.bf16.mxu0 0
        %649 = vmatpush2.bf16.msra.mxu0 0
        %650 = vmatprep.subr.bf16.mxu0 0
        %651 = vmatpush2.bf16.msra.mxu0 0
        %652 = vmatprep.subr.bf16.mxu0 0
        %653 = vmatpush2.bf16.msra.mxu0 0
        %654 = vmatprep.subr.bf16.mxu0 0
        %655 = vmatpush2.bf16.msra.mxu0 0
        %656 = vmatprep.subr.bf16.mxu0 0
        %657 = vmatpush2.bf16.msra.mxu0 0
        %658 = vmatprep.mubr.bf16.mxu0 0
        %659 = vmatmul.mubr.bf16.gmra.mxu0 %v576
        %v660 = vpop.f32.mrf.mxu0
        %v661 = vadd.f32 %v570, %v660
        %v662 = vpop.f32.mrf.mxu0
        %v663 = vpop.f32.mrf.mxu0
        %v664 = vadd.f32 %v570, %v663
        %v665 = vpop.f32.mrf.mxu0
        %666 = vdwg.mxu0
        %v667 = vmax.f32 %v661, 0.0
        %v668 = vmax.f32 %v664, 0.0
        %v669 = vpack.c.bf16 %v668, %v667
        %v671 = vlaneseq
        %v672 = vshrl.u32 %v671, 7
        %v673 = vsub.s32 0, %v672
        %v674 = vrot.slane %v562, %v673
        %v692 = vunpack.c.l.b16 %v497
        %v693 = vunpack.c.l.b16 %v498
        %v694 = vunpack.c.l.b16 %v499
        %v695 = vunpack.c.l.b16 %v500
        %v696 = vunpack.c.l.b16 %v501
        %v697 = vunpack.c.l.b16 %v502
        %v698 = vunpack.c.l.b16 %v503
        %v699 = vunpack.c.l.b16 %v504
        %v700 = vunpack.c.l.b16 %v505
        %v701 = vunpack.c.l.b16 %v506
        %v702 = vunpack.c.l.b16 %v507
        %v703 = vunpack.c.l.b16 %v508
        %v704 = vunpack.c.l.b16 %v509
        %v705 = vunpack.c.l.b16 %v510
        %v706 = vunpack.c.l.b16 %v511
        %v707 = vunpack.c.l.b16 %v512
        %v708 = vpack.c.b16 %v693, %v692
        %v709 = vpack.c.b16 %v695, %v694
        %v710 = vpack.c.b16 %v697, %v696
        %v711 = vpack.c.b16 %v699, %v698
        %v712 = vpack.c.b16 %v701, %v700
        %v713 = vpack.c.b16 %v703, %v702
        %v714 = vpack.c.b16 %v705, %v704
        %v715 = vpack.c.b16 %v707, %v706
        %724 = vmatprep.subr.bf16.mxu0 0
        %725 = vmatpush1.bf16.msra.mxu0 %v715
        %726 = vmatprep.subr.bf16.mxu0 0
        %727 = vmatpush1.bf16.msra.mxu0 %v714
        %728 = vmatprep.subr.bf16.mxu0 0
        %729 = vmatpush1.bf16.msra.mxu0 %v713
        %730 = vmatprep.subr.bf16.mxu0 0
        %731 = vmatpush1.bf16.msra.mxu0 %v712
        %732 = vmatprep.subr.bf16.mxu0 0
        %733 = vmatpush1.bf16.msra.mxu0 %v711
        %734 = vmatprep.subr.bf16.mxu0 0
        %735 = vmatpush1.bf16.msra.mxu0 %v710
        %736 = vmatprep.subr.bf16.mxu0 0
        %737 = vmatpush1.bf16.msra.mxu0 %v709
        %738 = vmatprep.subr.bf16.mxu0 0
        %739 = vmatpush1.bf16.msra.mxu0 %v708
        %740 = vmatprep.subr.bf16.mxu0 0
        %741 = vmatpush2.bf16.msra.mxu0 0
        %742 = vmatprep.subr.bf16.mxu0 0
        %743 = vmatpush2.bf16.msra.mxu0 0
        %744 = vmatprep.subr.bf16.mxu0 0
        %745 = vmatpush2.bf16.msra.mxu0 0
        %746 = vmatprep.subr.bf16.mxu0 0
        %747 = vmatpush2.bf16.msra.mxu0 0
        %748 = vmatprep.subr.bf16.mxu0 0
        %749 = vmatpush2.bf16.msra.mxu0 0
        %750 = vmatprep.subr.bf16.mxu0 0
        %751 = vmatpush2.bf16.msra.mxu0 0
        %752 = vmatprep.subr.bf16.mxu0 0
        %753 = vmatpush2.bf16.msra.mxu0 0
        %754 = vmatprep.subr.bf16.mxu0 0
        %755 = vmatpush2.bf16.msra.mxu0 0
        %756 = vmatprep.mubr.bf16.mxu0 0
        %757 = vmatmul.mubr.bf16.gmra.mxu0 %v669
        %v758 = vpop.f32.mrf.mxu0
        %v759 = vadd.f32 %v674, %v758
        %v760 = vpop.f32.mrf.mxu0
        %v761 = vpop.f32.mrf.mxu0
        %v762 = vadd.f32 %v674, %v761
        %v763 = vpop.f32.mrf.mxu0
        %764 = vdwg.mxu0
        %v765 = vtanh.pop %v759
        %v766 = vtanh.pop %v762
        %v768 = vlaneseq
        %v769 = vshrl.u32 %v768, 7
        %v770 = vsub.s32 0, %v769
        %v771 = vrot.slane %v563, %v770
        %v789 = vunpack.c.l.b16 %v513
        %v790 = vunpack.c.l.b16 %v514
        %v791 = vunpack.c.l.b16 %v515
        %v792 = vunpack.c.l.b16 %v516
        %v793 = vunpack.c.l.b16 %v517
        %v794 = vunpack.c.l.b16 %v518
        %v795 = vunpack.c.l.b16 %v519
        %v796 = vunpack.c.l.b16 %v520
        %v797 = vunpack.c.l.b16 %v521
        %v798 = vunpack.c.l.b16 %v522
        %v799 = vunpack.c.l.b16 %v523
        %v800 = vunpack.c.l.b16 %v524
        %v801 = vunpack.c.l.b16 %v525
        %v802 = vunpack.c.l.b16 %v526
        %v803 = vunpack.c.l.b16 %v527
        %v804 = vunpack.c.l.b16 %v528
        %v805 = vpack.c.b16 %v790, %v789
        %v806 = vpack.c.b16 %v792, %v791
        %v807 = vpack.c.b16 %v794, %v793
        %v808 = vpack.c.b16 %v796, %v795
        %v809 = vpack.c.b16 %v798, %v797
        %v810 = vpack.c.b16 %v800, %v799
        %v811 = vpack.c.b16 %v802, %v801
        %v812 = vpack.c.b16 %v804, %v803
        %821 = vmatprep.subr.bf16.mxu0 0
        %822 = vmatpush1.bf16.msra.mxu0 %v812
        %823 = vmatprep.subr.bf16.mxu0 0
        %824 = vmatpush1.bf16.msra.mxu0 %v811
        %825 = vmatprep.subr.bf16.mxu0 0
        %826 = vmatpush1.bf16.msra.mxu0 %v810
        %827 = vmatprep.subr.bf16.mxu0 0
        %828 = vmatpush1.bf16.msra.mxu0 %v809
        %829 = vmatprep.subr.bf16.mxu0 0
        %830 = vmatpush1.bf16.msra.mxu0 %v808
        %831 = vmatprep.subr.bf16.mxu0 0
        %832 = vmatpush1.bf16.msra.mxu0 %v807
        %833 = vmatprep.subr.bf16.mxu0 0
        %834 = vmatpush1.bf16.msra.mxu0 %v806
        %835 = vmatprep.subr.bf16.mxu0 0
        %836 = vmatpush1.bf16.msra.mxu0 %v805
        %837 = vmatprep.subr.bf16.mxu0 0
        %838 = vmatpush2.bf16.msra.mxu0 0
        %839 = vmatprep.subr.bf16.mxu0 0
        %840 = vmatpush2.bf16.msra.mxu0 0
        %841 = vmatprep.subr.bf16.mxu0 0
        %842 = vmatpush2.bf16.msra.mxu0 0
        %843 = vmatprep.subr.bf16.mxu0 0
        %844 = vmatpush2.bf16.msra.mxu0 0
        %845 = vmatprep.subr.bf16.mxu0 0
        %846 = vmatpush2.bf16.msra.mxu0 0
        %847 = vmatprep.subr.bf16.mxu0 0
        %848 = vmatpush2.bf16.msra.mxu0 0
        %849 = vmatprep.subr.bf16.mxu0 0
        %850 = vmatpush2.bf16.msra.mxu0 0
        %851 = vmatprep.subr.bf16.mxu0 0
        %852 = vmatpush2.bf16.msra.mxu0 0
        %853 = vmatprep.mubr.bf16.mxu0 0
        %854 = vmatmul.mubr.bf16.gmra.mxu0 %v669
        %v855 = vpop.f32.mrf.mxu0
        %v856 = vadd.f32 %v771, %v855
        %v857 = vpop.f32.mrf.mxu0
        %v858 = vpop.f32.mrf.mxu0
        %v859 = vadd.f32 %v771, %v858
        %v860 = vpop.f32.mrf.mxu0
        %861 = vdwg.mxu0
        %v862 = vtanh.pop %v856
        %v863 = vtanh.pop %v859
        %v865 = vlaneseq
        %v866 = vshrl.u32 %v865, 7
        %v867 = vsub.s32 0, %v866
        %v868 = vrot.slane %v564, %v867
        %v886 = vunpack.c.l.b16 %v529
        %v887 = vunpack.c.l.b16 %v530
        %v888 = vunpack.c.l.b16 %v531
        %v889 = vunpack.c.l.b16 %v532
        %v890 = vunpack.c.l.b16 %v533
        %v891 = vunpack.c.l.b16 %v534
        %v892 = vunpack.c.l.b16 %v535
        %v893 = vunpack.c.l.b16 %v536
        %v894 = vunpack.c.l.b16 %v537
        %v895 = vunpack.c.l.b16 %v538
        %v896 = vunpack.c.l.b16 %v539
        %v897 = vunpack.c.l.b16 %v540
        %v898 = vunpack.c.l.b16 %v541
        %v899 = vunpack.c.l.b16 %v542
        %v900 = vunpack.c.l.b16 %v543
        %v901 = vunpack.c.l.b16 %v544
        %v902 = vpack.c.b16 %v887, %v886
        %v903 = vpack.c.b16 %v889, %v888
        %v904 = vpack.c.b16 %v891, %v890
        %v905 = vpack.c.b16 %v893, %v892
        %v906 = vpack.c.b16 %v895, %v894
        %v907 = vpack.c.b16 %v897, %v896
        %v908 = vpack.c.b16 %v899, %v898
        %v909 = vpack.c.b16 %v901, %v900
        %918 = vmatprep.subr.bf16.mxu0 0
        %919 = vmatpush1.bf16.msra.mxu0 %v909
        %920 = vmatprep.subr.bf16.mxu0 0
        %921 = vmatpush1.bf16.msra.mxu0 %v908
        %922 = vmatprep.subr.bf16.mxu0 0
        %923 = vmatpush1.bf16.msra.mxu0 %v907
        %924 = vmatprep.subr.bf16.mxu0 0
        %925 = vmatpush1.bf16.msra.mxu0 %v906
        %926 = vmatprep.subr.bf16.mxu0 0
        %927 = vmatpush1.bf16.msra.mxu0 %v905
        %928 = vmatprep.subr.bf16.mxu0 0
        %929 = vmatpush1.bf16.msra.mxu0 %v904
        %930 = vmatprep.subr.bf16.mxu0 0
        %931 = vmatpush1.bf16.msra.mxu0 %v903
        %932 = vmatprep.subr.bf16.mxu0 0
        %933 = vmatpush1.bf16.msra.mxu0 %v902
        %934 = vmatprep.subr.bf16.mxu0 0
        %935 = vmatpush2.bf16.msra.mxu0 0
        %936 = vmatprep.subr.bf16.mxu0 0
        %937 = vmatpush2.bf16.msra.mxu0 0
        %938 = vmatprep.subr.bf16.mxu0 0
        %939 = vmatpush2.bf16.msra.mxu0 0
        %940 = vmatprep.subr.bf16.mxu0 0
        %941 = vmatpush2.bf16.msra.mxu0 0
        %942 = vmatprep.subr.bf16.mxu0 0
        %943 = vmatpush2.bf16.msra.mxu0 0
        %944 = vmatprep.subr.bf16.mxu0 0
        %945 = vmatpush2.bf16.msra.mxu0 0
        %946 = vmatprep.subr.bf16.mxu0 0
        %947 = vmatpush2.bf16.msra.mxu0 0
        %948 = vmatprep.subr.bf16.mxu0 0
        %949 = vmatpush2.bf16.msra.mxu0 0
        %950 = vmatprep.mubr.bf16.mxu0 0
        %951 = vmatmul.mubr.bf16.gmra.mxu0 %v669
        %v952 = vpop.f32.mrf.mxu0
        %v953 = vadd.f32 %v868, %v952
        %v954 = vpop.f32.mrf.mxu0
        %v955 = vpop.f32.mrf.mxu0
        %v956 = vadd.f32 %v868, %v955
        %v957 = vpop.f32.mrf.mxu0
        %958 = vdwg.mxu0
        %v959 = vtanh.pop %v953
        %v960 = vtanh.pop %v956
        %v961 = vpack.c.bf16 %v766, %v765
        %v962 = vpack.c.bf16 %v863, %v862
        %v963 = vpack.c.bf16 %v960, %v959
        %964 = vmatprep.subr.bf16.mxu0 0
        %965 = vmatpush1.bf16.xpose.msra.mxu0 0
        %966 = vmatprep.subr.bf16.mxu0 0
        %967 = vmatpush1.bf16.xpose.msra.mxu0 0
        %968 = vmatprep.subr.bf16.mxu0 0
        %969 = vmatpush1.bf16.xpose.msra.mxu0 0
        %970 = vmatprep.subr.bf16.mxu0 0
        %971 = vmatpush1.bf16.xpose.msra.mxu0 0
        %972 = vmatprep.subr.bf16.mxu0 0
        %973 = vmatpush1.bf16.xpose.msra.mxu0 0
        %974 = vmatprep.subr.bf16.mxu0 0
        %975 = vmatpush1.bf16.xpose.msra.mxu0 0
        %976 = vmatprep.subr.bf16.mxu0 0
        %977 = vmatpush1.bf16.xpose.msra.mxu0 0
        %978 = vmatprep.subr.bf16.mxu0 0
        %979 = vmatpush1.bf16.xpose.msra.mxu0 %v962
        %980 = vmatprep.subr.bf16.mxu0 0
        %981 = vmatpush2.bf16.xpose.msra.mxu0 0
        %982 = vmatprep.subr.bf16.mxu0 0
        %983 = vmatpush2.bf16.xpose.msra.mxu0 0
        %984 = vmatprep.subr.bf16.mxu0 0
        %985 = vmatpush2.bf16.xpose.msra.mxu0 0
        %986 = vmatprep.subr.bf16.mxu0 0
        %987 = vmatpush2.bf16.xpose.msra.mxu0 0
        %988 = vmatprep.subr.bf16.mxu0 0
        %989 = vmatpush2.bf16.xpose.msra.mxu0 0
        %990 = vmatprep.subr.bf16.mxu0 0
        %991 = vmatpush2.bf16.xpose.msra.mxu0 0
        %992 = vmatprep.subr.bf16.mxu0 0
        %993 = vmatpush2.bf16.xpose.msra.mxu0 0
        %994 = vmatprep.subr.bf16.mxu0 0
        %995 = vmatpush2.bf16.xpose.msra.mxu0 0
        %996 = vmatprep.mubr.bf16.mxu0 0
        %997 = vmatmul.mubr.bf16.gmra.mxu0 %v961
        %v998 = vpop.f32.mrf.mxu0
        %v999 = vadd.f32 0.0, %v998
        %v1000 = vpop.f32.mrf.mxu0
        %v1001 = vpop.f32.mrf.mxu0
        %v1002 = vadd.f32 0.0, %v1001
        %v1003 = vpop.f32.mrf.mxu0
        %1004 = vdwg.mxu0
        %v1005 = vlaneseq
        %v1006 = vand.u32 %v1005, 127
        %vm1007 = vcmp.lt.s32.totalorder %v1006, 8
        %v1008 = vsel %vm1007, %v999, -1e+30
        %v1009 = vsel %vm1007, %v1002, -1e+30
        %vm1010 = vcmask 130048
        %v1011 = vsel %vm1010, %v1008, -inf
        %1012 = vmax.xlane.f32.xlu0 %v1011
        %v1013 = vpop.xlane.xlu0 %1012
        %v1014 = vsel %vm1010, %v1009, -inf
        %1015 = vmax.xlane.f32.xlu0 %v1014
        %v1016 = vpop.xlane.xlu0 %1015
        %v1017 = vsub.f32 %v1008, %v1013
        %v1018 = vsub.f32 %v1009, %v1016
        %v1019 = vmul.f32 %v1017, 1.442695
        %v1020 = vpow.pop %v1019
        %v1021 = vmul.f32 %v1018, 1.442695
        %v1022 = vpow.pop %v1021
        %v1023 = vsel %vm1010, %v1020, 0.0
        %1024 = vadd.xlane.f32.xlu0 %v1023
        %v1025 = vpop.xlane.xlu0 %1024
        %v1026 = vsel %vm1010, %v1022, 0.0
        %1027 = vadd.xlane.f32.xlu0 %v1026
        %v1028 = vpop.xlane.xlu0 %1027
        %v1029 = vrcp.pop %v1025
        %v1030 = vrcp.pop %v1028
        %v1031 = vmul.f32 %v1020, %v1029
        %v1032 = vmul.f32 %v1022, %v1030
        %v1033 = vpack.c.bf16 %v1032, %v1031
        %v1035 = vsel %vm1010, %v1033, 0
        %1037 = vmatprep.subr.bf16.mxu0 0
        %1038 = vmatpush1.bf16.msra.mxu0 0
        %1039 = vmatprep.subr.bf16.mxu0 0
        %1040 = vmatpush1.bf16.msra.mxu0 0
        %1041 = vmatprep.subr.bf16.mxu0 0
        %1042 = vmatpush1.bf16.msra.mxu0 0
        %1043 = vmatprep.subr.bf16.mxu0 0
        %1044 = vmatpush1.bf16.msra.mxu0 0
        %1045 = vmatprep.subr.bf16.mxu0 0
        %1046 = vmatpush1.bf16.msra.mxu0 0
        %1047 = vmatprep.subr.bf16.mxu0 0
        %1048 = vmatpush1.bf16.msra.mxu0 0
        %1049 = vmatprep.subr.bf16.mxu0 0
        %1050 = vmatpush1.bf16.msra.mxu0 0
        %1051 = vmatprep.subr.bf16.mxu0 0
        %1052 = vmatpush1.bf16.msra.mxu0 %v963
        %1053 = vmatprep.subr.bf16.mxu0 0
        %1054 = vmatpush2.bf16.msra.mxu0 0
        %1055 = vmatprep.subr.bf16.mxu0 0
        %1056 = vmatpush2.bf16.msra.mxu0 0
        %1057 = vmatprep.subr.bf16.mxu0 0
        %1058 = vmatpush2.bf16.msra.mxu0 0
        %1059 = vmatprep.subr.bf16.mxu0 0
        %1060 = vmatpush2.bf16.msra.mxu0 0
        %1061 = vmatprep.subr.bf16.mxu0 0
        %1062 = vmatpush2.bf16.msra.mxu0 0
        %1063 = vmatprep.subr.bf16.mxu0 0
        %1064 = vmatpush2.bf16.msra.mxu0 0
        %1065 = vmatprep.subr.bf16.mxu0 0
        %1066 = vmatpush2.bf16.msra.mxu0 0
        %1067 = vmatprep.subr.bf16.mxu0 0
        %1068 = vmatpush2.bf16.msra.mxu0 0
        %1069 = vmatprep.mubr.bf16.mxu0 0
        %1070 = vmatmul.mubr.bf16.gmra.mxu0 %v1035
        %v1071 = vpop.f32.mrf.mxu0
        %v1072 = vadd.f32 0.0, %v1071
        %v1073 = vpop.f32.mrf.mxu0
        %v1074 = vpop.f32.mrf.mxu0
        %v1075 = vadd.f32 0.0, %v1074
        %v1076 = vpop.f32.mrf.mxu0
        %1077 = vdwg.mxu0
        %v1078 = vpack.c.bf16 %v1075, %v1072
        %v1080 = vlaneseq
        %v1081 = vshrl.u32 %v1080, 7
        %v1082 = vsub.s32 0, %v1081
        %v1083 = vrot.slane %v565, %v1082
        %v1101 = vunpack.c.l.b16 %v545
        %v1102 = vunpack.c.l.b16 %v546
        %v1103 = vunpack.c.l.b16 %v547
        %v1104 = vunpack.c.l.b16 %v548
        %v1105 = vunpack.c.l.b16 %v549
        %v1106 = vunpack.c.l.b16 %v550
        %v1107 = vunpack.c.l.b16 %v551
        %v1108 = vunpack.c.l.b16 %v552
        %v1109 = vunpack.c.l.b16 %v553
        %v1110 = vunpack.c.l.b16 %v554
        %v1111 = vunpack.c.l.b16 %v555
        %v1112 = vunpack.c.l.b16 %v556
        %v1113 = vunpack.c.l.b16 %v557
        %v1114 = vunpack.c.l.b16 %v558
        %v1115 = vunpack.c.l.b16 %v559
        %v1116 = vunpack.c.l.b16 %v560
        %v1117 = vpack.c.b16 %v1102, %v1101
        %v1118 = vpack.c.b16 %v1104, %v1103
        %v1119 = vpack.c.b16 %v1106, %v1105
        %v1120 = vpack.c.b16 %v1108, %v1107
        %v1121 = vpack.c.b16 %v1110, %v1109
        %v1122 = vpack.c.b16 %v1112, %v1111
        %v1123 = vpack.c.b16 %v1114, %v1113
        %v1124 = vpack.c.b16 %v1116, %v1115
        %1133 = vmatprep.subr.bf16.mxu0 0
        %1134 = vmatpush1.bf16.msra.mxu0 %v1124
        %1135 = vmatprep.subr.bf16.mxu0 0
        %1136 = vmatpush1.bf16.msra.mxu0 %v1123
        %1137 = vmatprep.subr.bf16.mxu0 0
        %1138 = vmatpush1.bf16.msra.mxu0 %v1122
        %1139 = vmatprep.subr.bf16.mxu0 0
        %1140 = vmatpush1.bf16.msra.mxu0 %v1121
        %1141 = vmatprep.subr.bf16.mxu0 0
        %1142 = vmatpush1.bf16.msra.mxu0 %v1120
        %1143 = vmatprep.subr.bf16.mxu0 0
        %1144 = vmatpush1.bf16.msra.mxu0 %v1119
        %1145 = vmatprep.subr.bf16.mxu0 0
        %1146 = vmatpush1.bf16.msra.mxu0 %v1118
        %1147 = vmatprep.subr.bf16.mxu0 0
        %1148 = vmatpush1.bf16.msra.mxu0 %v1117
        %1149 = vmatprep.subr.bf16.mxu0 0
        %1150 = vmatpush2.bf16.msra.mxu0 0
        %1151 = vmatprep.subr.bf16.mxu0 0
        %1152 = vmatpush2.bf16.msra.mxu0 0
        %1153 = vmatprep.subr.bf16.mxu0 0
        %1154 = vmatpush2.bf16.msra.mxu0 0
        %1155 = vmatprep.subr.bf16.mxu0 0
        %1156 = vmatpush2.bf16.msra.mxu0 0
        %1157 = vmatprep.subr.bf16.mxu0 0
        %1158 = vmatpush2.bf16.msra.mxu0 0
        %1159 = vmatprep.subr.bf16.mxu0 0
        %1160 = vmatpush2.bf16.msra.mxu0 0
        %1161 = vmatprep.subr.bf16.mxu0 0
        %1162 = vmatpush2.bf16.msra.mxu0 0
        %1163 = vmatprep.subr.bf16.mxu0 0
        %1164 = vmatpush2.bf16.msra.mxu0 0
        %1165 = vmatprep.mubr.bf16.mxu0 0
        %1166 = vmatmul.mubr.bf16.gmra.mxu0 %v1078
        %v1167 = vpop.f32.mrf.mxu0
        %v1168 = vadd.f32 %v1083, %v1167
        %v1169 = vpop.f32.mrf.mxu0
        %v1170 = vpop.f32.mrf.mxu0
        %v1171 = vadd.f32 %v1083, %v1170
        %v1172 = vpop.f32.mrf.mxu0
        %1173 = vdwg.mxu0
        %v1174 = vmax.f32 %v1168, 0.0
        %v1175 = vmax.f32 %v1171, 0.0
        %1176 = vst [vmem:[%s477] sm:$0xff] %v1174
        %1177 = vst [vmem:[%s477 + $0x8] sm:$0xff] %v1175
        %s1178 = sand.u32 %s275, 1
        %s1179 = scalar_lea.sflag [#allocation4], %s1178
        %s1180 = sand.u32 %s275, 1
        %s1181 = smul.addr %s1180, 16
        %s1182 = scalar_lea.vmem [#allocation13], %s1181
        // Predicated region
        $region89: #{tpu_custom_call.1} parent=63 // pred_check
          %p1183 = pneg %p285
        $region90: #{tpu_custom_call.1} parent=63 // pred_check_branch
          %1185 = sbr.rel (%p1183) target = $region92
        $region91: #{tpu_custom_call.1} parent=63 // pred_region
          %s1187 = ssub.s32 256, 256
          %1188 = vsyncadd %s1179, %s1187
          %s1189 = smul.addr %s31, 2
          %s1190 = smul.addr %s1189, 128
          %s1191 = scalar_lea.hbm %s11, %s1190
          %s1192 = sshll.u32 %s1182, 4
          %s1193 = int_to_ptr.vmem [resolvable:$true] %s1192
          %1198 = dma.vmem_to_hbm [thread:$0]  %s1193, 256, %s1191, %s1179, 128, 128, 8
        $region92: #{tpu_custom_call.1} parent=63 // pred_fallthru
          _
      $region64: #{tpu_custom_call.1} parent=5 // pred_fallthru
        _
      %p1199 = scmp.le.s32.totalorder 2, %s26
      // Predicated region
      $region93: #{tpu_custom_call.1} parent=5 // pred_check
        %p1200 = pneg %p1199
      $region94: #{tpu_custom_call.1} parent=5 // pred_check_branch
        %1202 = sbr.rel (%p1200) target = $region96
      $region95: #{tpu_custom_call.1} parent=5 // pred_region
        %s1203 = ssub.s32 %s26, 2
        // Predicated region
        $region97: #{tpu_custom_call.1} parent=95 // pred_check
          %p1204 = pneg %p291
        $region98: #{tpu_custom_call.1} parent=95 // pred_check_branch
          %1206 = sbr.rel (%p1204) target = $region100
        $region99: #{tpu_custom_call.1} parent=95 // pred_region
          %s1207 = sand.u32 %s276, 1
          %s1208 = scalar_lea.sflag [#allocation4], %s1207
          %s1209 = sand.u32 %s276, 1
          %s1210 = smul.addr %s1209, 16
          %s1211 = scalar_lea.vmem [#allocation13], %s1210
          %1212 = dma.done %s1208, 256
        $region100: #{tpu_custom_call.1} parent=95 // pred_fallthru
          _
      $region96: #{tpu_custom_call.1} parent=5 // pred_fallthru
        _
    $region6: #{tpu_custom_call.1} parent=1 // loop_footer
      %s30 = sadd.s32 1, %s26
    $region7: #{tpu_custom_call.1} parent=1 // loop_footer_branch
      %25 = sbr.rel target = $region3
    $region8: #{tpu_custom_call.1} parent=1 // loop_exit
      _
    %1213 = vsyncpa [#allocation3], 1
    %s1214 = scalar_lea.sflag [#allocation3], 1
    %1215 = vsyncpa %s1214, 1
    %1216 = vsyncpa [#allocation6], 1
    %1217 = vsyncpa [#allocation9], 1
    %1218 = vsyncpa [#allocation12], 1
    %1219 = vsyncpa [#allocation4], 1
    %s1220 = scalar_lea.sflag [#allocation4], 1
    %1221 = vsyncpa %s1220, 1

</llo_original>
